<compile_context>
chip_gen: v7x
topology: tpu7x:2x2x1
jax: 0.10.0
libtpu: 0.0.40
codegen_flags: <defaults>
</compile_context>

<pallas_src>
import functools

import jax
import jax.numpy as jnp
from jax.experimental import pallas as pl
from jax.experimental.pallas import tpu as pltpu


def _round_up(x, m):
    return ((x + m - 1) // m) * m


def _encoder_gru_kernel(x_ref, last_ref, *rest, hidden_size, num_layers,
                        time_block):
    """Streamed, direction-fused stepwise bidirectional GRU + last-step gather.

    Grid: (batch_tile index "parallel", time_block index "arbitrary").

    x_ref:    (time_block, tB, D) bf16   one time block, time-major
    last_ref: (tB, 1) int32              seq_len - 1 per row (-1 for padding)
    rest: 5*num_layers weight refs, then out ref, then 2 scratch refs.
          per layer: w_ih (in_l, 6H) bf16, w_hh (2H, 6H) bf16 (block-diag over
          directions), b_rz (1, 4H) f32 (b_ih+b_hh folded), b_ihn (1, 2H) f32,
          b_hhn (1, 2H) f32.  Fused gate columns: [r_f, r_b, z_f, z_b, n_f, n_b].
    o_ref:    (tB, out_pad) f32          lane-dense; first 2H cols hold result.
    h_scr:    (L, tB, 2H) f32 scratch    carried [h_fwd | h_bwd] per layer.
    out_scr:  (tB, 2H) f32 scratch       carried gathered output.
    """
    L = num_layers
    H = hidden_size
    two_h = 2 * H
    n_w = 5 * L
    w_refs = rest[:n_w]
    o_ref = rest[n_w]
    h_scr = rest[n_w + 1]
    out_scr = rest[n_w + 2]

    ti = pl.program_id(1)
    nt = pl.num_programs(1)
    tB = o_ref.shape[0]
    out_pad = o_ref.shape[1]

    # Reset carried state at the start of each batch tile's time sweep.
    @pl.when(ti == 0)
    def _():
        h_scr[...] = jnp.zeros_like(h_scr)
        out_scr[...] = jnp.zeros_like(out_scr)

    # Weights are VMEM-resident (constant index_map); load once per grid step
    # and pre-broadcast biases so the unrolled step loop emits no
    # broadcast_in_dim (JAX does not CSE them).
    Ws = []
    for l in range(L):
        w_ih = w_refs[5 * l + 0][...]                      # (in_l, 6H) bf16
        w_hh = w_refs[5 * l + 1][...]                      # (2H, 6H)  bf16
        b_rz = jnp.broadcast_to(w_refs[5 * l + 2][...], (tB, 4 * H))
        b_ihn = jnp.broadcast_to(w_refs[5 * l + 3][...], (tB, two_h))
        b_hhn = jnp.broadcast_to(w_refs[5 * l + 4][...], (tB, two_h))
        Ws.append((w_ih, w_hh, b_rz, b_ihn, b_hhn))

    last_b = jnp.broadcast_to(last_ref[...], (tB, two_h))  # int32, hoisted

    hs = [h_scr[l] for l in range(L)]                      # f32 carried states
    out = out_scr[...]                                     # f32 gathered output

    t0 = ti * time_block
    # Fixed, small unroll (time_block steps).  The time grid axis bounds code
    # size and live ranges no matter how long the full sequence is.
    for s in range(time_block):
        layer_in = x_ref[s]                                # (tB, D) bf16
        for l in range(L):
            w_ih, w_hh, b_rz, b_ihn, b_hhn = Ws[l]
            # Both directions in one pair of MXU dots; w_hh is block-diagonal
            # over [h_fwd | h_bwd] so each direction only sees its own state.
            gi = jnp.dot(layer_in, w_ih, preferred_element_type=jnp.float32)
            gh = jnp.dot(hs[l].astype(w_hh.dtype), w_hh,
                         preferred_element_type=jnp.float32)
            rz = jax.nn.sigmoid(gi[:, :4 * H] + gh[:, :4 * H] + b_rz)
            r = rz[:, :two_h]
            z = rz[:, two_h:]
            n = jnp.tanh(gi[:, 4 * H:] + b_ihn + r * (gh[:, 4 * H:] + b_hhn))
            hs[l] = (1.0 - z) * n + z * hs[l]
            layer_in = hs[l].astype(w_ih.dtype)            # bf16 for next layer
        # Rows whose last valid step is this global step pick up the top
        # layer's concat(h_fwd, h_bwd).
        out = jnp.where(last_b == (t0 + s), hs[L - 1], out)
        # TODO(synk): gate this select with pl.when on a per-block SMEM scalar
        # ("any row's last step falls in this time block") for long sequences.

    # Persist carried state for the next time block.
    for l in range(L):
        h_scr[l] = hs[l]
    out_scr[...] = out

    # Single lane-dense store of the gathered result on the last time block.
    @pl.when(ti == nt - 1)
    def _():
        o = out
        if out_pad > two_h:
            o = jnp.concatenate(
                [o, jnp.zeros((tB, out_pad - two_h), jnp.float32)], axis=-1)
        o_ref[...] = o.astype(o_ref.dtype)


def _fuse_layer_params(layer, hidden_size, matmul_dtype):
    """Fuse one layer's fwd/bwd GRU params into direction-fused operands.

    Input layer = (w_ih_f, w_hh_f, b_ih_f, b_hh_f, w_ih_b, w_hh_b, b_ih_b,
    b_hh_b) with w_ih (in_l, 3H), w_hh (H, 3H), b (1, 3H), gate order (r,z,n).
    Output: w_ih (in_l, 6H), w_hh (2H, 6H) block-diag, b_rz (1,4H) = b_ih+b_hh
    for r/z, b_ihn (1,2H), b_hhn (1,2H).  Fused columns: [r_f,r_b,z_f,z_b,n_f,n_b].
    """
    (w_ih_f, w_hh_f, b_ih_f, b_hh_f, w_ih_b, w_hh_b, b_ih_b, b_hh_b) = layer
    H = hidden_size

    def split(w):
        return w[:, :H], w[:, H:2 * H], w[:, 2 * H:]

    rf, zf, nf = split(w_ih_f)
    rb, zb, nb = split(w_ih_b)
    w_ih = jnp.concatenate([rf, rb, zf, zb, nf, nb], axis=1)           # (in, 6H)

    hrf, hzf, hnf = split(w_hh_f)
    hrb, hzb, hnb = split(w_hh_b)
    zero = jnp.zeros((H, H), w_hh_f.dtype)
    w_hh = jnp.concatenate(
        [jnp.concatenate([hrf, zero, hzf, zero, hnf, zero], axis=1),   # h_fwd rows
         jnp.concatenate([zero, hrb, zero, hzb, zero, hnb], axis=1)],  # h_bwd rows
        axis=0)                                                        # (2H, 6H)

    irf, izf, inn = split(b_ih_f)
    irb, izb, inb = split(b_ih_b)
    hrf2, hzf2, hnf2 = split(b_hh_f)
    hrb2, hzb2, hnb2 = split(b_hh_b)
    b_rz = jnp.concatenate(
        [irf + hrf2, irb + hrb2, izf + hzf2, izb + hzb2], axis=1)      # (1, 4H)
    b_ihn = jnp.concatenate([inn, inb], axis=1)                        # (1, 2H)
    b_hhn = jnp.concatenate([hnf2, hnb2], axis=1)                      # (1, 2H)

    return (w_ih.astype(matmul_dtype), w_hh.astype(matmul_dtype),
            b_rz.astype(jnp.float32), b_ihn.astype(jnp.float32),
            b_hhn.astype(jnp.float32))


def encoder_rnn_forward(x, seq_len, params, hidden_size, *,
                        time_block=8, batch_tile=8,
                        matmul_dtype=jnp.bfloat16):
    """Mirrors EncoderRNN.forward.  Returns hidden of shape (1, B, 2*hidden)."""
    seq_len = [int(s) for s in seq_len]
    B, S, D = x.shape
    T = max(seq_len)
    if T > S:
        raise ValueError("max(seq_len) exceeds the input sequence length")
    L = len(params)
    H = hidden_size
    out_w = 2 * H

    # Bucket T so distinct max(seq_len) values map to few compiled programs.
    # NOTE: rows with seq_len == 0 (last = -1) are never gathered -> zero row.
    T_pad = _round_up(max(T, 1), time_block)
    Bp = _round_up(B, batch_tile)
    out_pad = _round_up(out_w, 128)              # lane-dense output width

    last = jnp.asarray(seq_len, jnp.int32).reshape(B, 1) - 1
    if Bp != B:
        last = jnp.pad(last, ((0, Bp - B), (0, 0)), constant_values=-1)

    # TODO(synk): for production, read x batch-major directly via the BlockSpec
    # instead of this wrapper transpose (one extra XLA pass over x).
    x_tmaj = jnp.transpose(x[:, :T, :], (1, 0, 2))                     # (T, B, D)
    x_tmaj = jnp.pad(x_tmaj, ((0, T_pad - T), (0, Bp - B), (0, 0)))
    x_tmaj = x_tmaj.astype(matmul_dtype)

    fused = [_fuse_layer_params(layer, H, matmul_dtype) for layer in params]
    flat_w = [w for layer in fused for w in layer]

    nb = Bp // batch_tile
    nt = T_pad // time_block

    in_specs = [
        pl.BlockSpec((time_block, batch_tile, D), lambda bi, ti: (ti, bi, 0)),
        pl.BlockSpec((batch_tile, 1), lambda bi, ti: (bi, 0)),
    ]
    # Weights: full-array blocks with a constant index_map -> VMEM-resident
    # across all grid steps (never re-DMA'd).
    in_specs += [pl.BlockSpec(w.shape, lambda bi, ti: (0, 0)) for w in flat_w]

    out_specs = pl.BlockSpec((batch_tile, out_pad), lambda bi, ti: (bi, 0))

    kernel = functools.partial(_encoder_gru_kernel, hidden_size=H,
                               num_layers=L, time_block=time_block)

    out_padded = pl.pallas_call(
        kernel,
        out_shape=jax.ShapeDtypeStruct((Bp, out_pad), jnp.float32),
        grid_spec=pltpu.PrefetchScalarGridSpec(
            num_scalar_prefetch=0,
            grid=(nb, nt),
            in_specs=in_specs,
            out_specs=out_specs,
            scratch_shapes=[
                pltpu.VMEM((L, batch_tile, out_w), jnp.float32),  # carried h
                pltpu.VMEM((batch_tile, out_w), jnp.float32),     # gathered out
            ]),
        compiler_params=pltpu.CompilerParams(
            dimension_semantics=("parallel", "arbitrary")),
    )(x_tmaj, last, *flat_w)

    return out_padded[:B, :out_w][jnp.newaxis]


def _reference_forward(x, seq_len, params, hidden_size,
                       matmul_dtype=jnp.float32):
    """Pure-JAX emulation of the PyTorch stepwise bidirectional GRU loop."""
    B = x.shape[0]
    H = hidden_size
    L = len(params)
    T = max(int(s) for s in seq_len)

    def cell(xv, hv, w_ih, w_hh, b_ih, b_hh):
        gi = jnp.dot(xv.astype(matmul_dtype), w_ih.astype(matmul_dtype),
                     preferred_element_type=jnp.float32) + b_ih
        gh = jnp.dot(hv.astype(matmul_dtype), w_hh.astype(matmul_dtype),
                     preferred_element_type=jnp.float32) + b_hh
        r = jax.nn.sigmoid(gi[:, :H] + gh[:, :H])
        z = jax.nn.sigmoid(gi[:, H:2 * H] + gh[:, H:2 * H])
        n = jnp.tanh(gi[:, 2 * H:] + r * gh[:, 2 * H:])
        return (1.0 - z) * n + z * hv

    hs = [jnp.zeros((B, H), jnp.float32) for _ in range(2 * L)]
    step_outs = []
    for t in range(T):
        layer_in = x[:, t, :]
        for l in range(L):
            w = params[l]
            hs[2 * l] = cell(layer_in, hs[2 * l], w[0], w[1], w[2], w[3])
            hs[2 * l + 1] = cell(layer_in, hs[2 * l + 1], w[4], w[5], w[6], w[7])
            layer_in = jnp.concatenate([hs[2 * l], hs[2 * l + 1]], axis=-1)
        step_outs.append(layer_in)
    enc = jnp.stack(step_outs, axis=1)                     # (B, T, 2H)
    idx = jnp.asarray(seq_len, jnp.int32) - 1
    return enc[jnp.arange(B), idx, :][jnp.newaxis]


def make_params(key, input_size, hidden_size, num_layers):
    """PyTorch-style uniform(-1/sqrt(H), 1/sqrt(H)) init; weights pre-transposed
    to (in_features, 3H), gate order (r, z, n); biases shaped (1, 3H)."""
    H = hidden_size
    bound = 1.0 / (H ** 0.5)
    params = []
    for l in range(num_layers):
        in_l = input_size if l == 0 else 2 * H
        layer = []
        for _ in range(2):                                 # forward / backward
            key, k1, k2, k3, k4 = jax.random.split(key, 5)
            layer += [
                jax.random.uniform(k1, (in_l, 3 * H), jnp.float32, -bound, bound),
                jax.random.uniform(k2, (H, 3 * H), jnp.float32, -bound, bound),
                jax.random.uniform(k3, (1, 3 * H), jnp.float32, -bound, bound),
                jax.random.uniform(k4, (1, 3 * H), jnp.float32, -bound, bound),
            ]
        params.append(tuple(layer))
    return params


if __name__ == "__main__":
    key = jax.random.PRNGKey(0)
    k_x, k_p = jax.random.split(key)

    batch = 2
    seq = 8
    input_size = 16
    hidden_size = 32
    num_layers = 2
    seq_len = [8, 5]

    x = jax.random.normal(k_x, (batch, seq, input_size), dtype=jnp.float32)
    params = make_params(k_p, input_size, hidden_size, num_layers)

    # time_block=4 -> two time blocks, exercising the carried-state / pl.when
    # init-finalize path of the streamed time grid.
    hidden = encoder_rnn_forward(x, seq_len, params, hidden_size,
                                 time_block=4, batch_tile=8)
    hidden = jax.block_until_ready(hidden)

    assert hidden.shape == (1, batch, 2 * hidden_size)

    # Logic check vs a pure-JAX reference using the same bf16 MXU inputs, plus
    # a looser fidelity check vs the full-f32 reference.
    ref_bf16 = _reference_forward(x, seq_len, params, hidden_size,
                                  matmul_dtype=jnp.bfloat16)
    ref_f32 = _reference_forward(x, seq_len, params, hidden_size,
                                 matmul_dtype=jnp.float32)
    assert jnp.allclose(hidden, ref_bf16, atol=2e-3, rtol=2e-3), (
        float(jnp.max(jnp.abs(hidden - ref_bf16))))
    assert jnp.allclose(hidden, ref_f32, atol=5e-2, rtol=5e-2), (
        float(jnp.max(jnp.abs(hidden - ref_f32))))

    print("KERNEL_OK")
</pallas_src>

<mosaic_0001>
module attributes {stable_mosaic.version = 11 : i64} {
  func.func @_encoder_gru_kernel(%arg0: i32, %arg1: i32, %arg2: memref<4x8x16xbf16, #tpu.memory_space<vmem>>, %arg3: memref<8x1xi32, #tpu.memory_space<vmem>>, %arg4: memref<16x192xbf16, #tpu.memory_space<vmem>>, %arg5: memref<64x192xbf16, #tpu.memory_space<vmem>>, %arg6: memref<1x128xf32, #tpu.memory_space<vmem>>, %arg7: memref<1x64xf32, #tpu.memory_space<vmem>>, %arg8: memref<1x64xf32, #tpu.memory_space<vmem>>, %arg9: memref<64x192xbf16, #tpu.memory_space<vmem>>, %arg10: memref<64x192xbf16, #tpu.memory_space<vmem>>, %arg11: memref<1x128xf32, #tpu.memory_space<vmem>>, %arg12: memref<1x64xf32, #tpu.memory_space<vmem>>, %arg13: memref<1x64xf32, #tpu.memory_space<vmem>>, %arg14: memref<8x128xf32, #tpu.memory_space<vmem>>, %arg15: memref<2x8x64xf32, #tpu.memory_space<vmem>>, %arg16: memref<8x64xf32, #tpu.memory_space<vmem>>) attributes {dimension_semantics = [#tpu.dimension_semantics<parallel>, #tpu.dimension_semantics<arbitrary>], iteration_bounds = array<i64: 1, 2>, scalar_prefetch = 0 : i64, scratch_operands = 2 : i64, tpu.core_type = #tpu.core_type<tc>, window_params = [{transform_indices = @transform_0, window_bounds = array<i64: 4, 8, 16>}, {transform_indices = @transform_1, window_bounds = array<i64: 8, 1>}, {pipeline_mode = #tpu.pipeline_mode<synchronous>, transform_indices = @transform_2, window_bounds = array<i64: 16, 192>}, {pipeline_mode = #tpu.pipeline_mode<synchronous>, transform_indices = @transform_3, window_bounds = array<i64: 64, 192>}, {pipeline_mode = #tpu.pipeline_mode<synchronous>, transform_indices = @transform_4, window_bounds = array<i64: 1, 128>}, {pipeline_mode = #tpu.pipeline_mode<synchronous>, transform_indices = @transform_5, window_bounds = array<i64: 1, 64>}, {pipeline_mode = #tpu.pipeline_mode<synchronous>, transform_indices = @transform_6, window_bounds = array<i64: 1, 64>}, {pipeline_mode = #tpu.pipeline_mode<synchronous>, transform_indices = @transform_7, window_bounds = array<i64: 64, 192>}, {pipeline_mode = #tpu.pipeline_mode<synchronous>, transform_indices = @transform_8, window_bounds = array<i64: 64, 192>}, {pipeline_mode = #tpu.pipeline_mode<synchronous>, transform_indices = @transform_9, window_bounds = array<i64: 1, 128>}, {pipeline_mode = #tpu.pipeline_mode<synchronous>, transform_indices = @transform_10, window_bounds = array<i64: 1, 64>}, {pipeline_mode = #tpu.pipeline_mode<synchronous>, transform_indices = @transform_11, window_bounds = array<i64: 1, 64>}, {transform_indices = @transform_12, window_bounds = array<i64: 8, 128>}]} {
    %c0_i32 = arith.constant 0 : i32
    %0 = arith.cmpi eq, %arg1, %c0_i32 : i32
    %1 = arith.extui %0 : i1 to i32
    %c0_i32_0 = arith.constant 0 : i32
    %2 = arith.cmpi ne, %1, %c0_i32_0 : i32
    scf.if %2 {
      %cst_81 = arith.constant 0.000000e+00 : f32
      %280 = vector.broadcast %cst_81 : f32 to vector<2x8x64xf32>
      %c0_82 = arith.constant 0 : index
      %c0_83 = arith.constant 0 : index
      %c0_84 = arith.constant 0 : index
      %281 = vector.load %arg15[%c0_82, %c0_83, %c0_84] : memref<2x8x64xf32, #tpu.memory_space<vmem>>, vector<2x8x64xf32>
      tpu.vector_store %arg15[%c0_82, %c0_83, %c0_84], %280 {strides = array<i32>} : memref<2x8x64xf32, #tpu.memory_space<vmem>>, vector<2x8x64xf32>,
      %cst_85 = arith.constant 0.000000e+00 : f32
      %282 = vector.broadcast %cst_85 : f32 to vector<8x64xf32>
      %c0_86 = arith.constant 0 : index
      %c0_87 = arith.constant 0 : index
      %283 = vector.load %arg16[%c0_86, %c0_87] : memref<8x64xf32, #tpu.memory_space<vmem>>, vector<8x64xf32>
      tpu.vector_store %arg16[%c0_86, %c0_87], %282 {strides = array<i32>} : memref<8x64xf32, #tpu.memory_space<vmem>>, vector<8x64xf32>,
    } else {
    }
    %c0 = arith.constant 0 : index
    %c0_1 = arith.constant 0 : index
    %3 = vector.load %arg4[%c0, %c0_1] : memref<16x192xbf16, #tpu.memory_space<vmem>>, vector<16x192xbf16>
    %c0_2 = arith.constant 0 : index
    %c0_3 = arith.constant 0 : index
    %4 = vector.load %arg5[%c0_2, %c0_3] : memref<64x192xbf16, #tpu.memory_space<vmem>>, vector<64x192xbf16>
    %c0_4 = arith.constant 0 : index
    %c0_5 = arith.constant 0 : index
    %5 = vector.load %arg6[%c0_4, %c0_5] : memref<1x128xf32, #tpu.memory_space<vmem>>, vector<1x128xf32>
    %6 = vector.shape_cast %5 : vector<1x128xf32> to vector<1x128xf32>
    %7 = vector.broadcast %6 : vector<1x128xf32> to vector<8x128xf32>
    %c0_6 = arith.constant 0 : index
    %c0_7 = arith.constant 0 : index
    %8 = vector.load %arg7[%c0_6, %c0_7] : memref<1x64xf32, #tpu.memory_space<vmem>>, vector<1x64xf32>
    %9 = vector.shape_cast %8 : vector<1x64xf32> to vector<1x64xf32>
    %10 = vector.broadcast %9 : vector<1x64xf32> to vector<8x64xf32>
    %c0_8 = arith.constant 0 : index
    %c0_9 = arith.constant 0 : index
    %11 = vector.load %arg8[%c0_8, %c0_9] : memref<1x64xf32, #tpu.memory_space<vmem>>, vector<1x64xf32>
    %12 = vector.shape_cast %11 : vector<1x64xf32> to vector<1x64xf32>
    %13 = vector.broadcast %12 : vector<1x64xf32> to vector<8x64xf32>
    %c0_10 = arith.constant 0 : index
    %c0_11 = arith.constant 0 : index
    %14 = vector.load %arg9[%c0_10, %c0_11] : memref<64x192xbf16, #tpu.memory_space<vmem>>, vector<64x192xbf16>
    %c0_12 = arith.constant 0 : index
    %c0_13 = arith.constant 0 : index
    %15 = vector.load %arg10[%c0_12, %c0_13] : memref<64x192xbf16, #tpu.memory_space<vmem>>, vector<64x192xbf16>
    %c0_14 = arith.constant 0 : index
    %c0_15 = arith.constant 0 : index
    %16 = vector.load %arg11[%c0_14, %c0_15] : memref<1x128xf32, #tpu.memory_space<vmem>>, vector<1x128xf32>
    %17 = vector.shape_cast %16 : vector<1x128xf32> to vector<1x128xf32>
    %18 = vector.broadcast %17 : vector<1x128xf32> to vector<8x128xf32>
    %c0_16 = arith.constant 0 : index
    %c0_17 = arith.constant 0 : index
    %19 = vector.load %arg12[%c0_16, %c0_17] : memref<1x64xf32, #tpu.memory_space<vmem>>, vector<1x64xf32>
    %20 = vector.shape_cast %19 : vector<1x64xf32> to vector<1x64xf32>
    %21 = vector.broadcast %20 : vector<1x64xf32> to vector<8x64xf32>
    %c0_18 = arith.constant 0 : index
    %c0_19 = arith.constant 0 : index
    %22 = vector.load %arg13[%c0_18, %c0_19] : memref<1x64xf32, #tpu.memory_space<vmem>>, vector<1x64xf32>
    %23 = vector.shape_cast %22 : vector<1x64xf32> to vector<1x64xf32>
    %24 = vector.broadcast %23 : vector<1x64xf32> to vector<8x64xf32>
    %c0_20 = arith.constant 0 : index
    %c0_21 = arith.constant 0 : index
    %25 = vector.load %arg3[%c0_20, %c0_21] : memref<8x1xi32, #tpu.memory_space<vmem>>, vector<8x1xi32>
    %26 = vector.shape_cast %25 : vector<8x1xi32> to vector<8x1xi32>
    %27 = vector.broadcast %26 : vector<8x1xi32> to vector<8x64xi32>
    %c0_22 = arith.constant 0 : index
    %c0_23 = arith.constant 0 : index
    %c0_24 = arith.constant 0 : index
    %28 = vector.load %arg15[%c0_22, %c0_23, %c0_24] : memref<2x8x64xf32, #tpu.memory_space<vmem>>, vector<1x8x64xf32>
    %29 = vector.shape_cast %28 : vector<1x8x64xf32> to vector<8x64xf32>
    %c1 = arith.constant 1 : index
    %c0_25 = arith.constant 0 : index
    %c0_26 = arith.constant 0 : index
    %30 = vector.load %arg15[%c1, %c0_25, %c0_26] : memref<2x8x64xf32, #tpu.memory_space<vmem>>, vector<1x8x64xf32>
    %31 = vector.shape_cast %30 : vector<1x8x64xf32> to vector<8x64xf32>
    %c0_27 = arith.constant 0 : index
    %c0_28 = arith.constant 0 : index
    %32 = vector.load %arg16[%c0_27, %c0_28] : memref<8x64xf32, #tpu.memory_space<vmem>>, vector<8x64xf32>
    %c4_i32 = arith.constant 4 : i32
    %33 = arith.muli %arg1, %c4_i32 : i32
    %c0_29 = arith.constant 0 : index
    %c0_30 = arith.constant 0 : index
    %c0_31 = arith.constant 0 : index
    %34 = vector.load %arg2[%c0_29, %c0_30, %c0_31] : memref<4x8x16xbf16, #tpu.memory_space<vmem>>, vector<1x8x16xbf16>
    %35 = vector.shape_cast %34 : vector<1x8x16xbf16> to vector<8x16xbf16>
    %cst = arith.constant dense<0.000000e+00> : vector<8x192xf32>
    %36 = tpu.matmul %35, %3, %cst {dimension_numbers = #tpu.dot_dimension_numbers<[1], [0], [0], [1], [0, 0, 1, 1], [], []>} : vector<8x16xbf16>, vector<16x192xbf16>, vector<8x192xf32> -> vector<8x192xf32>
    %37 = arith.truncf %29 : vector<8x64xf32> to vector<8x64xbf16>
    %cst_32 = arith.constant dense<0.000000e+00> : vector<8x192xf32>
    %38 = tpu.matmul %37, %4, %cst_32 {dimension_numbers = #tpu.dot_dimension_numbers<[1], [0], [0], [1], [0, 0, 1, 1], [], []>} : vector<8x64xbf16>, vector<64x192xbf16>, vector<8x192xf32> -> vector<8x192xf32>
    %39 = vector.extract_strided_slice %36 {offsets = [0, 0], sizes = [8, 128], strides = [1, 1]} : vector<8x192xf32> to vector<8x128xf32>
    %40 = vector.extract_strided_slice %38 {offsets = [0, 0], sizes = [8, 128], strides = [1, 1]} : vector<8x192xf32> to vector<8x128xf32>
    %41 = arith.addf %39, %40 : vector<8x128xf32>
    %42 = arith.addf %41, %7 : vector<8x128xf32>
    %43 = arith.negf %42 : vector<8x128xf32>
    %44 = math.exp %43 : vector<8x128xf32>
    %cst_33 = arith.constant 1.000000e+00 : f32
    %45 = vector.broadcast %cst_33 : f32 to vector<8x128xf32>
    %46 = arith.addf %45, %44 : vector<8x128xf32>
    %47 = arith.divf %45, %46 : vector<8x128xf32>
    %48 = vector.extract_strided_slice %47 {offsets = [0, 0], sizes = [8, 64], strides = [1, 1]} : vector<8x128xf32> to vector<8x64xf32>
    %49 = vector.extract_strided_slice %47 {offsets = [0, 64], sizes = [8, 64], strides = [1, 1]} : vector<8x128xf32> to vector<8x64xf32>
    %50 = vector.extract_strided_slice %36 {offsets = [0, 128], sizes = [8, 64], strides = [1, 1]} : vector<8x192xf32> to vector<8x64xf32>
    %51 = arith.addf %50, %10 : vector<8x64xf32>
    %52 = vector.extract_strided_slice %38 {offsets = [0, 128], sizes = [8, 64], strides = [1, 1]} : vector<8x192xf32> to vector<8x64xf32>
    %53 = arith.addf %52, %13 : vector<8x64xf32>
    %54 = arith.mulf %48, %53 : vector<8x64xf32>
    %55 = arith.addf %51, %54 : vector<8x64xf32>
    %56 = math.tanh %55 : vector<8x64xf32>
    %cst_34 = arith.constant 1.000000e+00 : f32
    %57 = vector.broadcast %cst_34 : f32 to vector<8x64xf32>
    %58 = arith.subf %57, %49 : vector<8x64xf32>
    %59 = arith.mulf %58, %56 : vector<8x64xf32>
    %60 = arith.mulf %49, %29 : vector<8x64xf32>
    %61 = arith.addf %59, %60 : vector<8x64xf32>
    %62 = arith.truncf %61 : vector<8x64xf32> to vector<8x64xbf16>
    %cst_35 = arith.constant dense<0.000000e+00> : vector<8x192xf32>
    %63 = tpu.matmul %62, %14, %cst_35 {dimension_numbers = #tpu.dot_dimension_numbers<[1], [0], [0], [1], [0, 0, 1, 1], [], []>} : vector<8x64xbf16>, vector<64x192xbf16>, vector<8x192xf32> -> vector<8x192xf32>
    %64 = arith.truncf %31 : vector<8x64xf32> to vector<8x64xbf16>
    %cst_36 = arith.constant dense<0.000000e+00> : vector<8x192xf32>
    %65 = tpu.matmul %64, %15, %cst_36 {dimension_numbers = #tpu.dot_dimension_numbers<[1], [0], [0], [1], [0, 0, 1, 1], [], []>} : vector<8x64xbf16>, vector<64x192xbf16>, vector<8x192xf32> -> vector<8x192xf32>
    %66 = vector.extract_strided_slice %63 {offsets = [0, 0], sizes = [8, 128], strides = [1, 1]} : vector<8x192xf32> to vector<8x128xf32>
    %67 = vector.extract_strided_slice %65 {offsets = [0, 0], sizes = [8, 128], strides = [1, 1]} : vector<8x192xf32> to vector<8x128xf32>
    %68 = arith.addf %66, %67 : vector<8x128xf32>
    %69 = arith.addf %68, %18 : vector<8x128xf32>
    %70 = arith.negf %69 : vector<8x128xf32>
    %71 = math.exp %70 : vector<8x128xf32>
    %cst_37 = arith.constant 1.000000e+00 : f32
    %72 = vector.broadcast %cst_37 : f32 to vector<8x128xf32>
    %73 = arith.addf %72, %71 : vector<8x128xf32>
    %74 = arith.divf %72, %73 : vector<8x128xf32>
    %75 = vector.extract_strided_slice %74 {offsets = [0, 0], sizes = [8, 64], strides = [1, 1]} : vector<8x128xf32> to vector<8x64xf32>
    %76 = vector.extract_strided_slice %74 {offsets = [0, 64], sizes = [8, 64], strides = [1, 1]} : vector<8x128xf32> to vector<8x64xf32>
    %77 = vector.extract_strided_slice %63 {offsets = [0, 128], sizes = [8, 64], strides = [1, 1]} : vector<8x192xf32> to vector<8x64xf32>
    %78 = arith.addf %77, %21 : vector<8x64xf32>
    %79 = vector.extract_strided_slice %65 {offsets = [0, 128], sizes = [8, 64], strides = [1, 1]} : vector<8x192xf32> to vector<8x64xf32>
    %80 = arith.addf %79, %24 : vector<8x64xf32>
    %81 = arith.mulf %75, %80 : vector<8x64xf32>
    %82 = arith.addf %78, %81 : vector<8x64xf32>
    %83 = math.tanh %82 : vector<8x64xf32>
    %cst_38 = arith.constant 1.000000e+00 : f32
    %84 = vector.broadcast %cst_38 : f32 to vector<8x64xf32>
    %85 = arith.subf %84, %76 : vector<8x64xf32>
    %86 = arith.mulf %85, %83 : vector<8x64xf32>
    %87 = arith.mulf %76, %31 : vector<8x64xf32>
    %88 = arith.addf %86, %87 : vector<8x64xf32>
    %c0_i32_39 = arith.constant 0 : i32
    %89 = arith.addi %33, %c0_i32_39 : i32
    %90 = vector.broadcast %89 : i32 to vector<8x64xi32>
    %91 = arith.cmpi eq, %27, %90 : vector<8x64xi32>
    %92 = arith.select %91, %88, %32 : vector<8x64xi1>, vector<8x64xf32>
    %c1_40 = arith.constant 1 : index
    %c0_41 = arith.constant 0 : index
    %c0_42 = arith.constant 0 : index
    %93 = vector.load %arg2[%c1_40, %c0_41, %c0_42] : memref<4x8x16xbf16, #tpu.memory_space<vmem>>, vector<1x8x16xbf16>
    %94 = vector.shape_cast %93 : vector<1x8x16xbf16> to vector<8x16xbf16>
    %cst_43 = arith.constant dense<0.000000e+00> : vector<8x192xf32>
    %95 = tpu.matmul %94, %3, %cst_43 {dimension_numbers = #tpu.dot_dimension_numbers<[1], [0], [0], [1], [0, 0, 1, 1], [], []>} : vector<8x16xbf16>, vector<16x192xbf16>, vector<8x192xf32> -> vector<8x192xf32>
    %96 = arith.truncf %61 : vector<8x64xf32> to vector<8x64xbf16>
    %cst_44 = arith.constant dense<0.000000e+00> : vector<8x192xf32>
    %97 = tpu.matmul %96, %4, %cst_44 {dimension_numbers = #tpu.dot_dimension_numbers<[1], [0], [0], [1], [0, 0, 1, 1], [], []>} : vector<8x64xbf16>, vector<64x192xbf16>, vector<8x192xf32> -> vector<8x192xf32>
    %98 = vector.extract_strided_slice %95 {offsets = [0, 0], sizes = [8, 128], strides = [1, 1]} : vector<8x192xf32> to vector<8x128xf32>
    %99 = vector.extract_strided_slice %97 {offsets = [0, 0], sizes = [8, 128], strides = [1, 1]} : vector<8x192xf32> to vector<8x128xf32>
    %100 = arith.addf %98, %99 : vector<8x128xf32>
    %101 = arith.addf %100, %7 : vector<8x128xf32>
    %102 = arith.negf %101 : vector<8x128xf32>
    %103 = math.exp %102 : vector<8x128xf32>
    %cst_45 = arith.constant 1.000000e+00 : f32
    %104 = vector.broadcast %cst_45 : f32 to vector<8x128xf32>
    %105 = arith.addf %104, %103 : vector<8x128xf32>
    %106 = arith.divf %104, %105 : vector<8x128xf32>
    %107 = vector.extract_strided_slice %106 {offsets = [0, 0], sizes = [8, 64], strides = [1, 1]} : vector<8x128xf32> to vector<8x64xf32>
    %108 = vector.extract_strided_slice %106 {offsets = [0, 64], sizes = [8, 64], strides = [1, 1]} : vector<8x128xf32> to vector<8x64xf32>
    %109 = vector.extract_strided_slice %95 {offsets = [0, 128], sizes = [8, 64], strides = [1, 1]} : vector<8x192xf32> to vector<8x64xf32>
    %110 = arith.addf %109, %10 : vector<8x64xf32>
    %111 = vector.extract_strided_slice %97 {offsets = [0, 128], sizes = [8, 64], strides = [1, 1]} : vector<8x192xf32> to vector<8x64xf32>
    %112 = arith.addf %111, %13 : vector<8x64xf32>
    %113 = arith.mulf %107, %112 : vector<8x64xf32>
    %114 = arith.addf %110, %113 : vector<8x64xf32>
    %115 = math.tanh %114 : vector<8x64xf32>
    %cst_46 = arith.constant 1.000000e+00 : f32
    %116 = vector.broadcast %cst_46 : f32 to vector<8x64xf32>
    %117 = arith.subf %116, %108 : vector<8x64xf32>
    %118 = arith.mulf %117, %115 : vector<8x64xf32>
    %119 = arith.mulf %108, %61 : vector<8x64xf32>
    %120 = arith.addf %118, %119 : vector<8x64xf32>
    %121 = arith.truncf %120 : vector<8x64xf32> to vector<8x64xbf16>
    %cst_47 = arith.constant dense<0.000000e+00> : vector<8x192xf32>
    %122 = tpu.matmul %121, %14, %cst_47 {dimension_numbers = #tpu.dot_dimension_numbers<[1], [0], [0], [1], [0, 0, 1, 1], [], []>} : vector<8x64xbf16>, vector<64x192xbf16>, vector<8x192xf32> -> vector<8x192xf32>
    %123 = arith.truncf %88 : vector<8x64xf32> to vector<8x64xbf16>
    %cst_48 = arith.constant dense<0.000000e+00> : vector<8x192xf32>
    %124 = tpu.matmul %123, %15, %cst_48 {dimension_numbers = #tpu.dot_dimension_numbers<[1], [0], [0], [1], [0, 0, 1, 1], [], []>} : vector<8x64xbf16>, vector<64x192xbf16>, vector<8x192xf32> -> vector<8x192xf32>
    %125 = vector.extract_strided_slice %122 {offsets = [0, 0], sizes = [8, 128], strides = [1, 1]} : vector<8x192xf32> to vector<8x128xf32>
    %126 = vector.extract_strided_slice %124 {offsets = [0, 0], sizes = [8, 128], strides = [1, 1]} : vector<8x192xf32> to vector<8x128xf32>
    %127 = arith.addf %125, %126 : vector<8x128xf32>
    %128 = arith.addf %127, %18 : vector<8x128xf32>
    %129 = arith.negf %128 : vector<8x128xf32>
    %130 = math.exp %129 : vector<8x128xf32>
    %cst_49 = arith.constant 1.000000e+00 : f32
    %131 = vector.broadcast %cst_49 : f32 to vector<8x128xf32>
    %132 = arith.addf %131, %130 : vector<8x128xf32>
    %133 = arith.divf %131, %132 : vector<8x128xf32>
    %134 = vector.extract_strided_slice %133 {offsets = [0, 0], sizes = [8, 64], strides = [1, 1]} : vector<8x128xf32> to vector<8x64xf32>
    %135 = vector.extract_strided_slice %133 {offsets = [0, 64], sizes = [8, 64], strides = [1, 1]} : vector<8x128xf32> to vector<8x64xf32>
    %136 = vector.extract_strided_slice %122 {offsets = [0, 128], sizes = [8, 64], strides = [1, 1]} : vector<8x192xf32> to vector<8x64xf32>
    %137 = arith.addf %136, %21 : vector<8x64xf32>
    %138 = vector.extract_strided_slice %124 {offsets = [0, 128], sizes = [8, 64], strides = [1, 1]} : vector<8x192xf32> to vector<8x64xf32>
    %139 = arith.addf %138, %24 : vector<8x64xf32>
    %140 = arith.mulf %134, %139 : vector<8x64xf32>
    %141 = arith.addf %137, %140 : vector<8x64xf32>
    %142 = math.tanh %141 : vector<8x64xf32>
    %cst_50 = arith.constant 1.000000e+00 : f32
    %143 = vector.broadcast %cst_50 : f32 to vector<8x64xf32>
    %144 = arith.subf %143, %135 : vector<8x64xf32>
    %145 = arith.mulf %144, %142 : vector<8x64xf32>
    %146 = arith.mulf %135, %88 : vector<8x64xf32>
    %147 = arith.addf %145, %146 : vector<8x64xf32>
    %c1_i32 = arith.constant 1 : i32
    %148 = arith.addi %33, %c1_i32 : i32
    %149 = vector.broadcast %148 : i32 to vector<8x64xi32>
    %150 = arith.cmpi eq, %27, %149 : vector<8x64xi32>
    %151 = arith.select %150, %147, %92 : vector<8x64xi1>, vector<8x64xf32>
    %c2 = arith.constant 2 : index
    %c0_51 = arith.constant 0 : index
    %c0_52 = arith.constant 0 : index
    %152 = vector.load %arg2[%c2, %c0_51, %c0_52] : memref<4x8x16xbf16, #tpu.memory_space<vmem>>, vector<1x8x16xbf16>
    %153 = vector.shape_cast %152 : vector<1x8x16xbf16> to vector<8x16xbf16>
    %cst_53 = arith.constant dense<0.000000e+00> : vector<8x192xf32>
    %154 = tpu.matmul %153, %3, %cst_53 {dimension_numbers = #tpu.dot_dimension_numbers<[1], [0], [0], [1], [0, 0, 1, 1], [], []>} : vector<8x16xbf16>, vector<16x192xbf16>, vector<8x192xf32> -> vector<8x192xf32>
    %155 = arith.truncf %120 : vector<8x64xf32> to vector<8x64xbf16>
    %cst_54 = arith.constant dense<0.000000e+00> : vector<8x192xf32>
    %156 = tpu.matmul %155, %4, %cst_54 {dimension_numbers = #tpu.dot_dimension_numbers<[1], [0], [0], [1], [0, 0, 1, 1], [], []>} : vector<8x64xbf16>, vector<64x192xbf16>, vector<8x192xf32> -> vector<8x192xf32>
    %157 = vector.extract_strided_slice %154 {offsets = [0, 0], sizes = [8, 128], strides = [1, 1]} : vector<8x192xf32> to vector<8x128xf32>
    %158 = vector.extract_strided_slice %156 {offsets = [0, 0], sizes = [8, 128], strides = [1, 1]} : vector<8x192xf32> to vector<8x128xf32>
    %159 = arith.addf %157, %158 : vector<8x128xf32>
    %160 = arith.addf %159, %7 : vector<8x128xf32>
    %161 = arith.negf %160 : vector<8x128xf32>
    %162 = math.exp %161 : vector<8x128xf32>
    %cst_55 = arith.constant 1.000000e+00 : f32
    %163 = vector.broadcast %cst_55 : f32 to vector<8x128xf32>
    %164 = arith.addf %163, %162 : vector<8x128xf32>
    %165 = arith.divf %163, %164 : vector<8x128xf32>
    %166 = vector.extract_strided_slice %165 {offsets = [0, 0], sizes = [8, 64], strides = [1, 1]} : vector<8x128xf32> to vector<8x64xf32>
    %167 = vector.extract_strided_slice %165 {offsets = [0, 64], sizes = [8, 64], strides = [1, 1]} : vector<8x128xf32> to vector<8x64xf32>
    %168 = vector.extract_strided_slice %154 {offsets = [0, 128], sizes = [8, 64], strides = [1, 1]} : vector<8x192xf32> to vector<8x64xf32>
    %169 = arith.addf %168, %10 : vector<8x64xf32>
    %170 = vector.extract_strided_slice %156 {offsets = [0, 128], sizes = [8, 64], strides = [1, 1]} : vector<8x192xf32> to vector<8x64xf32>
    %171 = arith.addf %170, %13 : vector<8x64xf32>
    %172 = arith.mulf %166, %171 : vector<8x64xf32>
    %173 = arith.addf %169, %172 : vector<8x64xf32>
    %174 = math.tanh %173 : vector<8x64xf32>
    %cst_56 = arith.constant 1.000000e+00 : f32
    %175 = vector.broadcast %cst_56 : f32 to vector<8x64xf32>
    %176 = arith.subf %175, %167 : vector<8x64xf32>
    %177 = arith.mulf %176, %174 : vector<8x64xf32>
    %178 = arith.mulf %167, %120 : vector<8x64xf32>
    %179 = arith.addf %177, %178 : vector<8x64xf32>
    %180 = arith.truncf %179 : vector<8x64xf32> to vector<8x64xbf16>
    %cst_57 = arith.constant dense<0.000000e+00> : vector<8x192xf32>
    %181 = tpu.matmul %180, %14, %cst_57 {dimension_numbers = #tpu.dot_dimension_numbers<[1], [0], [0], [1], [0, 0, 1, 1], [], []>} : vector<8x64xbf16>, vector<64x192xbf16>, vector<8x192xf32> -> vector<8x192xf32>
    %182 = arith.truncf %147 : vector<8x64xf32> to vector<8x64xbf16>
    %cst_58 = arith.constant dense<0.000000e+00> : vector<8x192xf32>
    %183 = tpu.matmul %182, %15, %cst_58 {dimension_numbers = #tpu.dot_dimension_numbers<[1], [0], [0], [1], [0, 0, 1, 1], [], []>} : vector<8x64xbf16>, vector<64x192xbf16>, vector<8x192xf32> -> vector<8x192xf32>
    %184 = vector.extract_strided_slice %181 {offsets = [0, 0], sizes = [8, 128], strides = [1, 1]} : vector<8x192xf32> to vector<8x128xf32>
    %185 = vector.extract_strided_slice %183 {offsets = [0, 0], sizes = [8, 128], strides = [1, 1]} : vector<8x192xf32> to vector<8x128xf32>
    %186 = arith.addf %184, %185 : vector<8x128xf32>
    %187 = arith.addf %186, %18 : vector<8x128xf32>
    %188 = arith.negf %187 : vector<8x128xf32>
    %189 = math.exp %188 : vector<8x128xf32>
    %cst_59 = arith.constant 1.000000e+00 : f32
    %190 = vector.broadcast %cst_59 : f32 to vector<8x128xf32>
    %191 = arith.addf %190, %189 : vector<8x128xf32>
    %192 = arith.divf %190, %191 : vector<8x128xf32>
    %193 = vector.extract_strided_slice %192 {offsets = [0, 0], sizes = [8, 64], strides = [1, 1]} : vector<8x128xf32> to vector<8x64xf32>
    %194 = vector.extract_strided_slice %192 {offsets = [0, 64], sizes = [8, 64], strides = [1, 1]} : vector<8x128xf32> to vector<8x64xf32>
    %195 = vector.extract_strided_slice %181 {offsets = [0, 128], sizes = [8, 64], strides = [1, 1]} : vector<8x192xf32> to vector<8x64xf32>
    %196 = arith.addf %195, %21 : vector<8x64xf32>
    %197 = vector.extract_strided_slice %183 {offsets = [0, 128], sizes = [8, 64], strides = [1, 1]} : vector<8x192xf32> to vector<8x64xf32>
    %198 = arith.addf %197, %24 : vector<8x64xf32>
    %199 = arith.mulf %193, %198 : vector<8x64xf32>
    %200 = arith.addf %196, %199 : vector<8x64xf32>
    %201 = math.tanh %200 : vector<8x64xf32>
    %cst_60 = arith.constant 1.000000e+00 : f32
    %202 = vector.broadcast %cst_60 : f32 to vector<8x64xf32>
    %203 = arith.subf %202, %194 : vector<8x64xf32>
    %204 = arith.mulf %203, %201 : vector<8x64xf32>
    %205 = arith.mulf %194, %147 : vector<8x64xf32>
    %206 = arith.addf %204, %205 : vector<8x64xf32>
    %c2_i32 = arith.constant 2 : i32
    %207 = arith.addi %33, %c2_i32 : i32
    %208 = vector.broadcast %207 : i32 to vector<8x64xi32>
    %209 = arith.cmpi eq, %27, %208 : vector<8x64xi32>
    %210 = arith.select %209, %206, %151 : vector<8x64xi1>, vector<8x64xf32>
    %c3 = arith.constant 3 : index
    %c0_61 = arith.constant 0 : index
    %c0_62 = arith.constant 0 : index
    %211 = vector.load %arg2[%c3, %c0_61, %c0_62] : memref<4x8x16xbf16, #tpu.memory_space<vmem>>, vector<1x8x16xbf16>
    %212 = vector.shape_cast %211 : vector<1x8x16xbf16> to vector<8x16xbf16>
    %cst_63 = arith.constant dense<0.000000e+00> : vector<8x192xf32>
    %213 = tpu.matmul %212, %3, %cst_63 {dimension_numbers = #tpu.dot_dimension_numbers<[1], [0], [0], [1], [0, 0, 1, 1], [], []>} : vector<8x16xbf16>, vector<16x192xbf16>, vector<8x192xf32> -> vector<8x192xf32>
    %214 = arith.truncf %179 : vector<8x64xf32> to vector<8x64xbf16>
    %cst_64 = arith.constant dense<0.000000e+00> : vector<8x192xf32>
    %215 = tpu.matmul %214, %4, %cst_64 {dimension_numbers = #tpu.dot_dimension_numbers<[1], [0], [0], [1], [0, 0, 1, 1], [], []>} : vector<8x64xbf16>, vector<64x192xbf16>, vector<8x192xf32> -> vector<8x192xf32>
    %216 = vector.extract_strided_slice %213 {offsets = [0, 0], sizes = [8, 128], strides = [1, 1]} : vector<8x192xf32> to vector<8x128xf32>
    %217 = vector.extract_strided_slice %215 {offsets = [0, 0], sizes = [8, 128], strides = [1, 1]} : vector<8x192xf32> to vector<8x128xf32>
    %218 = arith.addf %216, %217 : vector<8x128xf32>
    %219 = arith.addf %218, %7 : vector<8x128xf32>
    %220 = arith.negf %219 : vector<8x128xf32>
    %221 = math.exp %220 : vector<8x128xf32>
    %cst_65 = arith.constant 1.000000e+00 : f32
    %222 = vector.broadcast %cst_65 : f32 to vector<8x128xf32>
    %223 = arith.addf %222, %221 : vector<8x128xf32>
    %224 = arith.divf %222, %223 : vector<8x128xf32>
    %225 = vector.extract_strided_slice %224 {offsets = [0, 0], sizes = [8, 64], strides = [1, 1]} : vector<8x128xf32> to vector<8x64xf32>
    %226 = vector.extract_strided_slice %224 {offsets = [0, 64], sizes = [8, 64], strides = [1, 1]} : vector<8x128xf32> to vector<8x64xf32>
    %227 = vector.extract_strided_slice %213 {offsets = [0, 128], sizes = [8, 64], strides = [1, 1]} : vector<8x192xf32> to vector<8x64xf32>
    %228 = arith.addf %227, %10 : vector<8x64xf32>
    %229 = vector.extract_strided_slice %215 {offsets = [0, 128], sizes = [8, 64], strides = [1, 1]} : vector<8x192xf32> to vector<8x64xf32>
    %230 = arith.addf %229, %13 : vector<8x64xf32>
    %231 = arith.mulf %225, %230 : vector<8x64xf32>
    %232 = arith.addf %228, %231 : vector<8x64xf32>
    %233 = math.tanh %232 : vector<8x64xf32>
    %cst_66 = arith.constant 1.000000e+00 : f32
    %234 = vector.broadcast %cst_66 : f32 to vector<8x64xf32>
    %235 = arith.subf %234, %226 : vector<8x64xf32>
    %236 = arith.mulf %235, %233 : vector<8x64xf32>
    %237 = arith.mulf %226, %179 : vector<8x64xf32>
    %238 = arith.addf %236, %237 : vector<8x64xf32>
    %239 = arith.truncf %238 : vector<8x64xf32> to vector<8x64xbf16>
    %cst_67 = arith.constant dense<0.000000e+00> : vector<8x192xf32>
    %240 = tpu.matmul %239, %14, %cst_67 {dimension_numbers = #tpu.dot_dimension_numbers<[1], [0], [0], [1], [0, 0, 1, 1], [], []>} : vector<8x64xbf16>, vector<64x192xbf16>, vector<8x192xf32> -> vector<8x192xf32>
    %241 = arith.truncf %206 : vector<8x64xf32> to vector<8x64xbf16>
    %cst_68 = arith.constant dense<0.000000e+00> : vector<8x192xf32>
    %242 = tpu.matmul %241, %15, %cst_68 {dimension_numbers = #tpu.dot_dimension_numbers<[1], [0], [0], [1], [0, 0, 1, 1], [], []>} : vector<8x64xbf16>, vector<64x192xbf16>, vector<8x192xf32> -> vector<8x192xf32>
    %243 = vector.extract_strided_slice %240 {offsets = [0, 0], sizes = [8, 128], strides = [1, 1]} : vector<8x192xf32> to vector<8x128xf32>
    %244 = vector.extract_strided_slice %242 {offsets = [0, 0], sizes = [8, 128], strides = [1, 1]} : vector<8x192xf32> to vector<8x128xf32>
    %245 = arith.addf %243, %244 : vector<8x128xf32>
    %246 = arith.addf %245, %18 : vector<8x128xf32>
    %247 = arith.negf %246 : vector<8x128xf32>
    %248 = math.exp %247 : vector<8x128xf32>
    %cst_69 = arith.constant 1.000000e+00 : f32
    %249 = vector.broadcast %cst_69 : f32 to vector<8x128xf32>
    %250 = arith.addf %249, %248 : vector<8x128xf32>
    %251 = arith.divf %249, %250 : vector<8x128xf32>
    %252 = vector.extract_strided_slice %251 {offsets = [0, 0], sizes = [8, 64], strides = [1, 1]} : vector<8x128xf32> to vector<8x64xf32>
    %253 = vector.extract_strided_slice %251 {offsets = [0, 64], sizes = [8, 64], strides = [1, 1]} : vector<8x128xf32> to vector<8x64xf32>
    %254 = vector.extract_strided_slice %240 {offsets = [0, 128], sizes = [8, 64], strides = [1, 1]} : vector<8x192xf32> to vector<8x64xf32>
    %255 = arith.addf %254, %21 : vector<8x64xf32>
    %256 = vector.extract_strided_slice %242 {offsets = [0, 128], sizes = [8, 64], strides = [1, 1]} : vector<8x192xf32> to vector<8x64xf32>
    %257 = arith.addf %256, %24 : vector<8x64xf32>
    %258 = arith.mulf %252, %257 : vector<8x64xf32>
    %259 = arith.addf %255, %258 : vector<8x64xf32>
    %260 = math.tanh %259 : vector<8x64xf32>
    %cst_70 = arith.constant 1.000000e+00 : f32
    %261 = vector.broadcast %cst_70 : f32 to vector<8x64xf32>
    %262 = arith.subf %261, %253 : vector<8x64xf32>
    %263 = arith.mulf %262, %260 : vector<8x64xf32>
    %264 = arith.mulf %253, %206 : vector<8x64xf32>
    %265 = arith.addf %263, %264 : vector<8x64xf32>
    %c3_i32 = arith.constant 3 : i32
    %266 = arith.addi %33, %c3_i32 : i32
    %267 = vector.broadcast %266 : i32 to vector<8x64xi32>
    %268 = arith.cmpi eq, %27, %267 : vector<8x64xi32>
    %269 = arith.select %268, %265, %210 : vector<8x64xi1>, vector<8x64xf32>
    %c0_71 = arith.constant 0 : index
    %c0_72 = arith.constant 0 : index
    %c0_73 = arith.constant 0 : index
    %270 = vector.load %arg15[%c0_71, %c0_72, %c0_73] : memref<2x8x64xf32, #tpu.memory_space<vmem>>, vector<1x8x64xf32>
    %271 = vector.shape_cast %270 : vector<1x8x64xf32> to vector<8x64xf32>
    %272 = vector.shape_cast %238 : vector<8x64xf32> to vector<1x8x64xf32>
    tpu.vector_store %arg15[%c0_71, %c0_72, %c0_73], %272 {strides = array<i32>} : memref<2x8x64xf32, #tpu.memory_space<vmem>>, vector<1x8x64xf32>,
    %c1_74 = arith.constant 1 : index
    %c0_75 = arith.constant 0 : index
    %c0_76 = arith.constant 0 : index
    %273 = vector.load %arg15[%c1_74, %c0_75, %c0_76] : memref<2x8x64xf32, #tpu.memory_space<vmem>>, vector<1x8x64xf32>
    %274 = vector.shape_cast %273 : vector<1x8x64xf32> to vector<8x64xf32>
    %275 = vector.shape_cast %265 : vector<8x64xf32> to vector<1x8x64xf32>
    tpu.vector_store %arg15[%c1_74, %c0_75, %c0_76], %275 {strides = array<i32>} : memref<2x8x64xf32, #tpu.memory_space<vmem>>, vector<1x8x64xf32>,
    %c0_77 = arith.constant 0 : index
    %c0_78 = arith.constant 0 : index
    %276 = vector.load %arg16[%c0_77, %c0_78] : memref<8x64xf32, #tpu.memory_space<vmem>>, vector<8x64xf32>
    tpu.vector_store %arg16[%c0_77, %c0_78], %269 {strides = array<i32>} : memref<8x64xf32, #tpu.memory_space<vmem>>, vector<8x64xf32>,
    %c1_i32_79 = arith.constant 1 : i32
    %277 = arith.cmpi eq, %arg1, %c1_i32_79 : i32
    %278 = arith.extui %277 : i1 to i32
    %c0_i32_80 = arith.constant 0 : i32
    %279 = arith.cmpi ne, %278, %c0_i32_80 : i32
    scf.if %279 {
      %cst_81 = arith.constant 0.000000e+00 : f32
      %280 = vector.broadcast %cst_81 : f32 to vector<8x64xf32>
      %281 = tpu.concatenate %269, %280 in 1 : vector<8x64xf32>, vector<8x64xf32> -> vector<8x128xf32>
      %c0_82 = arith.constant 0 : index
      %c0_83 = arith.constant 0 : index
      %282 = vector.load %arg14[%c0_82, %c0_83] : memref<8x128xf32, #tpu.memory_space<vmem>>, vector<8x128xf32>
      tpu.vector_store %arg14[%c0_82, %c0_83], %281 {strides = array<i32>} : memref<8x128xf32, #tpu.memory_space<vmem>>, vector<8x128xf32>,
    } else {
    }
    return
  }
  func.func @transform_0(%arg0: i32, %arg1: i32) -> (i32, i32, i32) {
    %c0_i32 = arith.constant 0 : i32
    %c0_i32_0 = arith.constant 0 : i32
    return %arg1, %arg0, %c0_i32 : i32, i32, i32
  }
  func.func @transform_1(%arg0: i32, %arg1: i32) -> (i32, i32) {
    %c0_i32 = arith.constant 0 : i32
    %c0_i32_0 = arith.constant 0 : i32
    return %arg0, %c0_i32 : i32, i32
  }
  func.func @transform_2(%arg0: i32, %arg1: i32) -> (i32, i32) {
    %c0_i32 = arith.constant 0 : i32
    %c0_i32_0 = arith.constant 0 : i32
    %c0_i32_1 = arith.constant 0 : i32
    return %c0_i32, %c0_i32_0 : i32, i32
  }
  func.func @transform_3(%arg0: i32, %arg1: i32) -> (i32, i32) {
    %c0_i32 = arith.constant 0 : i32
    %c0_i32_0 = arith.constant 0 : i32
    %c0_i32_1 = arith.constant 0 : i32
    return %c0_i32, %c0_i32_0 : i32, i32
  }
  func.func @transform_4(%arg0: i32, %arg1: i32) -> (i32, i32) {
    %c0_i32 = arith.constant 0 : i32
    %c0_i32_0 = arith.constant 0 : i32
    %c0_i32_1 = arith.constant 0 : i32
    return %c0_i32, %c0_i32_0 : i32, i32
  }
  func.func @transform_5(%arg0: i32, %arg1: i32) -> (i32, i32) {
    %c0_i32 = arith.constant 0 : i32
    %c0_i32_0 = arith.constant 0 : i32
    %c0_i32_1 = arith.constant 0 : i32
    return %c0_i32, %c0_i32_0 : i32, i32
  }
  func.func @transform_6(%arg0: i32, %arg1: i32) -> (i32, i32) {
    %c0_i32 = arith.constant 0 : i32
    %c0_i32_0 = arith.constant 0 : i32
    %c0_i32_1 = arith.constant 0 : i32
    return %c0_i32, %c0_i32_0 : i32, i32
  }
  func.func @transform_7(%arg0: i32, %arg1: i32) -> (i32, i32) {
    %c0_i32 = arith.constant 0 : i32
    %c0_i32_0 = arith.constant 0 : i32
    %c0_i32_1 = arith.constant 0 : i32
    return %c0_i32, %c0_i32_0 : i32, i32
  }
  func.func @transform_8(%arg0: i32, %arg1: i32) -> (i32, i32) {
    %c0_i32 = arith.constant 0 : i32
    %c0_i32_0 = arith.constant 0 : i32
    %c0_i32_1 = arith.constant 0 : i32
    return %c0_i32, %c0_i32_0 : i32, i32
  }
  func.func @transform_9(%arg0: i32, %arg1: i32) -> (i32, i32) {
    %c0_i32 = arith.constant 0 : i32
    %c0_i32_0 = arith.constant 0 : i32
    %c0_i32_1 = arith.constant 0 : i32
    return %c0_i32, %c0_i32_0 : i32, i32
  }
  func.func @transform_10(%arg0: i32, %arg1: i32) -> (i32, i32) {
    %c0_i32 = arith.constant 0 : i32
    %c0_i32_0 = arith.constant 0 : i32
    %c0_i32_1 = arith.constant 0 : i32
    return %c0_i32, %c0_i32_0 : i32, i32
  }
  func.func @transform_11(%arg0: i32, %arg1: i32) -> (i32, i32) {
    %c0_i32 = arith.constant 0 : i32
    %c0_i32_0 = arith.constant 0 : i32
    %c0_i32_1 = arith.constant 0 : i32
    return %c0_i32, %c0_i32_0 : i32, i32
  }
  func.func @transform_12(%arg0: i32, %arg1: i32) -> (i32, i32) {
    %c0_i32 = arith.constant 0 : i32
    %c0_i32_0 = arith.constant 0 : i32
    return %arg0, %c0_i32 : i32, i32
  }
}

</mosaic_0001>

<llo_original>
// kernel: tpu_custom_call.1
$region0: #{tpu_custom_call.1}
  #allocation0 [shape = 'u32[]', space=smem, size = 0x4, offset = 0x4, fixed_abs, tag = 'smem constant byte address 0x4 - core index']
  #allocation1 [shape = 'u32[144,128]{1,0:T(1,128)}', space=vmem, size = 0x12000, scoped, tag = 'internal scratch']
  #allocation2 [shape = 'f32[2,8,64]{2,1,0:T(8,128)}', space=vmem, size = 0x2000, scoped, tag = 'scratch operand']
  #allocation3 [shape = 'f32[8,64]{1,0:T(8,128)}', space=vmem, size = 0x1000, scoped, tag = 'scratch operand']
  %s0 = inlined_call_operand.hbm [shape: bf16[8,8,16], index: 0, kind: input, shape index: {}]
  %s1 = inlined_call_operand.vmem [shape: s32[8,1], index: 1, kind: input, shape index: {}]
  %s2 = inlined_call_operand.vmem [shape: bf16[16,192], index: 2, kind: input, shape index: {}]
  %s3 = inlined_call_operand.hbm [shape: bf16[64,192], index: 3, kind: input, shape index: {}]
  %s4 = inlined_call_operand.vmem [shape: f32[1,128], index: 4, kind: input, shape index: {}]
  %s5 = inlined_call_operand.vmem [shape: f32[1,64], index: 5, kind: input, shape index: {}]
  %s6 = inlined_call_operand.vmem [shape: f32[1,64], index: 6, kind: input, shape index: {}]
  %s7 = inlined_call_operand.hbm [shape: bf16[64,192], index: 7, kind: input, shape index: {}]
  %s8 = inlined_call_operand.hbm [shape: bf16[64,192], index: 8, kind: input, shape index: {}]
  %s9 = inlined_call_operand.vmem [shape: f32[1,128], index: 9, kind: input, shape index: {}]
  %s10 = inlined_call_operand.vmem [shape: f32[1,64], index: 10, kind: input, shape index: {}]
  %s11 = inlined_call_operand.vmem [shape: f32[1,64], index: 11, kind: input, shape index: {}]
  %s12 = inlined_call_operand.hbm [shape: f32[8,128], index: 12, kind: output, shape index: {}]
  %s13 = sld [smem:[#allocation0]]
  $region105: #{tpu_custom_call.1} parent=0
    _
  %s15 = ssub.s32 1, %s13
  %s16 = scalar_select 0, %s15, %s13
  $region1: #{tpu_custom_call.1} parent=0
    #allocation4 [shape = 'u8[16384]{0}', space=vmem, size = 0x4000, scoped, tag = 'input window, operand 0']
    #allocation5 [shape = 's32[2]{0}', space=sflag, size = 0x8, scoped, tag = 'scoped memory for tpu_custom_call.1']
    #allocation6 [shape = 's32[2]{0}', space=sflag, size = 0x8, scoped, tag = 'scoped memory for tpu_custom_call.1']
    #allocation7 [shape = 'u8[32768]{0}', space=vmem, size = 0x8000, scoped, tag = 'input window, operand 3, single buffered']
    #allocation8 [shape = 's32[1]{0}', space=sflag, size = 0x4, scoped, tag = 'scoped memory for tpu_custom_call.1']
    #allocation9 [shape = 'u8[32768]{0}', space=vmem, size = 0x8000, scoped, tag = 'input window, operand 7, single buffered']
    #allocation10 [shape = 'u8[32768]{0}', space=vmem, size = 0x8000, scoped, tag = 'input window, operand 8, single buffered']
    #allocation11 [shape = 's32[1]{0}', space=sflag, size = 0x4, scoped, tag = 'scoped memory for tpu_custom_call.1']
    #allocation12 [shape = 'u8[4096]{0}', space=vmem, size = 0x1000, scoped, tag = 'output window, operand 0, single buffered']
    %17 = vsyncpa [#allocation5], 0
    %s18 = scalar_lea.sflag [#allocation5], 1
    %19 = vsyncpa %s18, 0
    %20 = vsyncpa [#allocation8], 0
    %21 = vsyncpa [#allocation11], 0
    %22 = vsyncpa [#allocation6], 0
    loop: start=0, step=1, limit=4
    $region2: #{tpu_custom_call.1} parent=1 // loop_pre_header
      _
    $region3: #{tpu_custom_call.1} parent=1 // loop_header
      %s24 = sphi 0, %s28
      %p25 = scmp.ge.s32.totalorder %s24, 4
      %s31 = sphi 0, %s43
      %s32 = sphi 0, %s39
      %s33 = sphi 0, %s31
      %s34 = sphi 0, %s32
      %s35 = sphi 0, %s33
      %s36 = sphi 0, %s34
      %s48 = sphi 0, %s50
      %s51 = sphi 0, %s48
      %s52 = sphi 0, %s51
      %s68 = sphi 0, %s52
      %s74 = sphi 0, %s76
      %s77 = sphi 0, %s74
      %s78 = sphi 0, %s77
      %s94 = sphi 0, %s78
      %s98 = sphi 0, %s98
      %s100 = sphi 0, %s98
      %s101 = sphi 0, %s100
      %s115 = sphi 0, %s101
      %s119 = sphi 0, %s119
      %s121 = sphi 0, %s119
      %s122 = sphi 0, %s121
      %s136 = sphi 0, %s122
      %s140 = sphi 0, %s140
      %s142 = sphi 0, %s140
      %s143 = sphi 0, %s142
      %s157 = sphi 0, %s143
      %s161 = sphi 0, %s161
      %s163 = sphi 0, %s161
      %s164 = sphi 0, %s163
      %s178 = sphi 0, %s164
      %s182 = sphi 0, %s182
      %s184 = sphi 0, %s182
      %s185 = sphi 0, %s184
      %s199 = sphi 0, %s185
      %s203 = sphi 0, %s203
      %s205 = sphi 0, %s203
      %s206 = sphi 0, %s205
      %s220 = sphi 0, %s206
      %s224 = sphi 0, %s224
      %s226 = sphi 0, %s224
      %s227 = sphi 0, %s226
      %s241 = sphi 0, %s227
      %s245 = sphi 0, %s245
      %s247 = sphi 0, %s245
      %s248 = sphi 0, %s247
      %s262 = sphi 0, %s248
      %s266 = sphi 0, %s266
      %s268 = sphi 0, %s266
      %s269 = sphi 0, %s268
      %s283 = sphi 0, %s269
      %s287 = sphi 0, %s287
      %s289 = sphi 0, %s287
      %s290 = sphi 0, %s289
      %s304 = sphi 0, %s290
      %s310 = sphi 0, %s312
      %s313 = sphi 0, %s310
      %s314 = sphi 0, %s313
      %s330 = sphi 0, %s314
    $region4: #{tpu_custom_call.1} parent=1 // loop_header_branch
      %27 = sbr.rel (%p25) target = $region8
    $region5: #{tpu_custom_call.1} parent=1 // loop_body
      %s29 = ssub.s32 %s24, 1
      %s30 = ssub.s32 %s24, 2
      %s37 = sadd.s32 1, %s32
      %p38 = scmp.ge.s32.totalorder %s37, 2
      %s39 = scalar_select %p38, 0, %s37
      %s40 = sadd.s32 1, %s31
      %s41 = scalar_select %p38, %s40, %s31
      %p42 = scmp.ge.s32.totalorder %s41, 1
      %s43 = scalar_select %p42, 0, %s41
      %s44 = ssub.s32 %s32, %s39
      %s45 = ssub.s32 %s31, %s43
      %s46 = sor.u32 %s44, %s45
      %p47 = scmp.eq.s32.totalorder %s46, 0
      %s49 = sadd.s32 %s48, 1
      %s50 = scalar_select %p47, %s48, %s49
      %p53 = pneg %p47
      %p54 = scmp.eq.s32.totalorder %s24, 1
      %p55 = por %p53, %p54
      %p56 = scmp.ne.s32.totalorder %s48, %s51
      %p57 = scmp.eq.s32.totalorder %s24, 0
      %p58 = por %p56, %p57
      %p59 = scmp.ne.s32.totalorder %s48, %s51
      %p60 = scmp.eq.s32.totalorder %s29, 1
      %p61 = por %p59, %p60
      %p62 = scmp.ne.s32.totalorder %s51, %s52
      %p63 = scmp.eq.s32.totalorder %s29, 0
      %p64 = por %p62, %p63
      %p65 = scmp.ne.s32.totalorder %s51, %s52
      %p66 = scmp.eq.s32.totalorder %s30, 1
      %p67 = por %p65, %p66
      %p69 = scmp.ne.s32.totalorder %s52, %s68
      %p70 = scmp.eq.s32.totalorder %s30, 0
      %p71 = por %p69, %p70
      %s72 = ssub.s32 %s31, %s43
      %p73 = scmp.eq.s32.totalorder %s72, 0
      %s75 = sadd.s32 %s74, 1
      %s76 = scalar_select %p73, %s74, %s75
      %p79 = pneg %p73
      %p80 = scmp.eq.s32.totalorder %s24, 1
      %p81 = por %p79, %p80
      %p82 = scmp.ne.s32.totalorder %s74, %s77
      %p83 = scmp.eq.s32.totalorder %s24, 0
      %p84 = por %p82, %p83
      %p85 = scmp.ne.s32.totalorder %s74, %s77
      %p86 = scmp.eq.s32.totalorder %s29, 1
      %p87 = por %p85, %p86
      %p88 = scmp.ne.s32.totalorder %s77, %s78
      %p89 = scmp.eq.s32.totalorder %s29, 0
      %p90 = por %p88, %p89
      %p91 = scmp.ne.s32.totalorder %s77, %s78
      %p92 = scmp.eq.s32.totalorder %s30, 1
      %p93 = por %p91, %p92
      %p95 = scmp.ne.s32.totalorder %s78, %s94
      %p96 = scmp.eq.s32.totalorder %s30, 0
      %p97 = por %p95, %p96
      %s99 = sadd.s32 %s98, 1
      %p102 = scmp.eq.s32.totalorder %s24, 1
      %p103 = scmp.ne.s32.totalorder %s98, %s100
      %p104 = scmp.eq.s32.totalorder %s24, 0
      %p105 = por %p103, %p104
      %p106 = scmp.ne.s32.totalorder %s98, %s100
      %p107 = scmp.eq.s32.totalorder %s29, 1
      %p108 = por %p106, %p107
      %p109 = scmp.ne.s32.totalorder %s100, %s101
      %p110 = scmp.eq.s32.totalorder %s29, 0
      %p111 = por %p109, %p110
      %p112 = scmp.ne.s32.totalorder %s100, %s101
      %p113 = scmp.eq.s32.totalorder %s30, 1
      %p114 = por %p112, %p113
      %p116 = scmp.ne.s32.totalorder %s101, %s115
      %p117 = scmp.eq.s32.totalorder %s30, 0
      %p118 = por %p116, %p117
      %s120 = sadd.s32 %s119, 1
      %p123 = scmp.eq.s32.totalorder %s24, 1
      %p124 = scmp.ne.s32.totalorder %s119, %s121
      %p125 = scmp.eq.s32.totalorder %s24, 0
      %p126 = por %p124, %p125
      %p127 = scmp.ne.s32.totalorder %s119, %s121
      %p128 = scmp.eq.s32.totalorder %s29, 1
      %p129 = por %p127, %p128
      %p130 = scmp.ne.s32.totalorder %s121, %s122
      %p131 = scmp.eq.s32.totalorder %s29, 0
      %p132 = por %p130, %p131
      %p133 = scmp.ne.s32.totalorder %s121, %s122
      %p134 = scmp.eq.s32.totalorder %s30, 1
      %p135 = por %p133, %p134
      %p137 = scmp.ne.s32.totalorder %s122, %s136
      %p138 = scmp.eq.s32.totalorder %s30, 0
      %p139 = por %p137, %p138
      %s141 = sadd.s32 %s140, 1
      %p144 = scmp.eq.s32.totalorder %s24, 1
      %p145 = scmp.ne.s32.totalorder %s140, %s142
      %p146 = scmp.eq.s32.totalorder %s24, 0
      %p147 = por %p145, %p146
      %p148 = scmp.ne.s32.totalorder %s140, %s142
      %p149 = scmp.eq.s32.totalorder %s29, 1
      %p150 = por %p148, %p149
      %p151 = scmp.ne.s32.totalorder %s142, %s143
      %p152 = scmp.eq.s32.totalorder %s29, 0
      %p153 = por %p151, %p152
      %p154 = scmp.ne.s32.totalorder %s142, %s143
      %p155 = scmp.eq.s32.totalorder %s30, 1
      %p156 = por %p154, %p155
      %p158 = scmp.ne.s32.totalorder %s143, %s157
      %p159 = scmp.eq.s32.totalorder %s30, 0
      %p160 = por %p158, %p159
      %s162 = sadd.s32 %s161, 1
      %p165 = scmp.eq.s32.totalorder %s24, 1
      %p166 = scmp.ne.s32.totalorder %s161, %s163
      %p167 = scmp.eq.s32.totalorder %s24, 0
      %p168 = por %p166, %p167
      %p169 = scmp.ne.s32.totalorder %s161, %s163
      %p170 = scmp.eq.s32.totalorder %s29, 1
      %p171 = por %p169, %p170
      %p172 = scmp.ne.s32.totalorder %s163, %s164
      %p173 = scmp.eq.s32.totalorder %s29, 0
      %p174 = por %p172, %p173
      %p175 = scmp.ne.s32.totalorder %s163, %s164
      %p176 = scmp.eq.s32.totalorder %s30, 1
      %p177 = por %p175, %p176
      %p179 = scmp.ne.s32.totalorder %s164, %s178
      %p180 = scmp.eq.s32.totalorder %s30, 0
      %p181 = por %p179, %p180
      %s183 = sadd.s32 %s182, 1
      %p186 = scmp.eq.s32.totalorder %s24, 1
      %p187 = scmp.ne.s32.totalorder %s182, %s184
      %p188 = scmp.eq.s32.totalorder %s24, 0
      %p189 = por %p187, %p188
      %p190 = scmp.ne.s32.totalorder %s182, %s184
      %p191 = scmp.eq.s32.totalorder %s29, 1
      %p192 = por %p190, %p191
      %p193 = scmp.ne.s32.totalorder %s184, %s185
      %p194 = scmp.eq.s32.totalorder %s29, 0
      %p195 = por %p193, %p194
      %p196 = scmp.ne.s32.totalorder %s184, %s185
      %p197 = scmp.eq.s32.totalorder %s30, 1
      %p198 = por %p196, %p197
      %p200 = scmp.ne.s32.totalorder %s185, %s199
      %p201 = scmp.eq.s32.totalorder %s30, 0
      %p202 = por %p200, %p201
      %s204 = sadd.s32 %s203, 1
      %p207 = scmp.eq.s32.totalorder %s24, 1
      %p208 = scmp.ne.s32.totalorder %s203, %s205
      %p209 = scmp.eq.s32.totalorder %s24, 0
      %p210 = por %p208, %p209
      %p211 = scmp.ne.s32.totalorder %s203, %s205
      %p212 = scmp.eq.s32.totalorder %s29, 1
      %p213 = por %p211, %p212
      %p214 = scmp.ne.s32.totalorder %s205, %s206
      %p215 = scmp.eq.s32.totalorder %s29, 0
      %p216 = por %p214, %p215
      %p217 = scmp.ne.s32.totalorder %s205, %s206
      %p218 = scmp.eq.s32.totalorder %s30, 1
      %p219 = por %p217, %p218
      %p221 = scmp.ne.s32.totalorder %s206, %s220
      %p222 = scmp.eq.s32.totalorder %s30, 0
      %p223 = por %p221, %p222
      %s225 = sadd.s32 %s224, 1
      %p228 = scmp.eq.s32.totalorder %s24, 1
      %p229 = scmp.ne.s32.totalorder %s224, %s226
      %p230 = scmp.eq.s32.totalorder %s24, 0
      %p231 = por %p229, %p230
      %p232 = scmp.ne.s32.totalorder %s224, %s226
      %p233 = scmp.eq.s32.totalorder %s29, 1
      %p234 = por %p232, %p233
      %p235 = scmp.ne.s32.totalorder %s226, %s227
      %p236 = scmp.eq.s32.totalorder %s29, 0
      %p237 = por %p235, %p236
      %p238 = scmp.ne.s32.totalorder %s226, %s227
      %p239 = scmp.eq.s32.totalorder %s30, 1
      %p240 = por %p238, %p239
      %p242 = scmp.ne.s32.totalorder %s227, %s241
      %p243 = scmp.eq.s32.totalorder %s30, 0
      %p244 = por %p242, %p243
      %s246 = sadd.s32 %s245, 1
      %p249 = scmp.eq.s32.totalorder %s24, 1
      %p250 = scmp.ne.s32.totalorder %s245, %s247
      %p251 = scmp.eq.s32.totalorder %s24, 0
      %p252 = por %p250, %p251
      %p253 = scmp.ne.s32.totalorder %s245, %s247
      %p254 = scmp.eq.s32.totalorder %s29, 1
      %p255 = por %p253, %p254
      %p256 = scmp.ne.s32.totalorder %s247, %s248
      %p257 = scmp.eq.s32.totalorder %s29, 0
      %p258 = por %p256, %p257
      %p259 = scmp.ne.s32.totalorder %s247, %s248
      %p260 = scmp.eq.s32.totalorder %s30, 1
      %p261 = por %p259, %p260
      %p263 = scmp.ne.s32.totalorder %s248, %s262
      %p264 = scmp.eq.s32.totalorder %s30, 0
      %p265 = por %p263, %p264
      %s267 = sadd.s32 %s266, 1
      %p270 = scmp.eq.s32.totalorder %s24, 1
      %p271 = scmp.ne.s32.totalorder %s266, %s268
      %p272 = scmp.eq.s32.totalorder %s24, 0
      %p273 = por %p271, %p272
      %p274 = scmp.ne.s32.totalorder %s266, %s268
      %p275 = scmp.eq.s32.totalorder %s29, 1
      %p276 = por %p274, %p275
      %p277 = scmp.ne.s32.totalorder %s268, %s269
      %p278 = scmp.eq.s32.totalorder %s29, 0
      %p279 = por %p277, %p278
      %p280 = scmp.ne.s32.totalorder %s268, %s269
      %p281 = scmp.eq.s32.totalorder %s30, 1
      %p282 = por %p280, %p281
      %p284 = scmp.ne.s32.totalorder %s269, %s283
      %p285 = scmp.eq.s32.totalorder %s30, 0
      %p286 = por %p284, %p285
      %s288 = sadd.s32 %s287, 1
      %p291 = scmp.eq.s32.totalorder %s24, 1
      %p292 = scmp.ne.s32.totalorder %s287, %s289
      %p293 = scmp.eq.s32.totalorder %s24, 0
      %p294 = por %p292, %p293
      %p295 = scmp.ne.s32.totalorder %s287, %s289
      %p296 = scmp.eq.s32.totalorder %s29, 1
      %p297 = por %p295, %p296
      %p298 = scmp.ne.s32.totalorder %s289, %s290
      %p299 = scmp.eq.s32.totalorder %s29, 0
      %p300 = por %p298, %p299
      %p301 = scmp.ne.s32.totalorder %s289, %s290
      %p302 = scmp.eq.s32.totalorder %s30, 1
      %p303 = por %p301, %p302
      %p305 = scmp.ne.s32.totalorder %s290, %s304
      %p306 = scmp.eq.s32.totalorder %s30, 0
      %p307 = por %p305, %p306
      %s308 = ssub.s32 %s31, %s43
      %p309 = scmp.eq.s32.totalorder %s308, 0
      %s311 = sadd.s32 %s310, 1
      %s312 = scalar_select %p309, %s310, %s311
      %p315 = pneg %p309
      %p316 = scmp.eq.s32.totalorder %s24, 1
      %p317 = por %p315, %p316
      %p318 = scmp.ne.s32.totalorder %s310, %s313
      %p319 = scmp.eq.s32.totalorder %s24, 0
      %p320 = por %p318, %p319
      %p321 = scmp.ne.s32.totalorder %s310, %s313
      %p322 = scmp.eq.s32.totalorder %s29, 1
      %p323 = por %p321, %p322
      %p324 = scmp.ne.s32.totalorder %s313, %s314
      %p325 = scmp.eq.s32.totalorder %s29, 0
      %p326 = por %p324, %p325
      %p327 = scmp.ne.s32.totalorder %s313, %s314
      %p328 = scmp.eq.s32.totalorder %s30, 1
      %p329 = por %p327, %p328
      %p331 = scmp.ne.s32.totalorder %s314, %s330
      %p332 = scmp.eq.s32.totalorder %s30, 0
      %p333 = por %p331, %p332
      %p334 = scmp.le.s32.totalorder 1, %s24
      %p335 = scmp.lt.s32.totalorder %s24, 3
      %p336 = pnand %p334, %p335
      %p337 = pneg %p336
      // Predicated region
      $region9: #{tpu_custom_call.1} parent=5 // pred_check
        _
      $region10: #{tpu_custom_call.1} parent=5 // pred_check_branch
        %339 = sbr.rel (%p336) target = $region12
      $region11: #{tpu_custom_call.1} parent=5 // pred_region
        %s340 = ssub.s32 %s24, 1
        // Predicated region
        $region13: #{tpu_custom_call.1} parent=11 // pred_check
          %p341 = pneg %p90
        $region14: #{tpu_custom_call.1} parent=11 // pred_check_branch
          %343 = sbr.rel (%p341) target = $region16
        $region15: #{tpu_custom_call.1} parent=11 // pred_region
          %p344 = scmp.lt.s32.totalorder %s33, 0
          %s345 = scalar_select %p344, %s33, 0
          %s346 = smul.addr %s345, 8
          %s347 = scalar_lea.vmem %s1, %s346
        $region16: #{tpu_custom_call.1} parent=11 // pred_fallthru
          _
        // Predicated region
        $region17: #{tpu_custom_call.1} parent=11 // pred_check
          %p348 = pneg %p111
        $region18: #{tpu_custom_call.1} parent=11 // pred_check_branch
          %350 = sbr.rel (%p348) target = $region20
        $region19: #{tpu_custom_call.1} parent=11 // pred_region
          _
        $region20: #{tpu_custom_call.1} parent=11 // pred_fallthru
          _
        // Predicated region
        $region21: #{tpu_custom_call.1} parent=11 // pred_check
          %p351 = pneg %p132
        $region22: #{tpu_custom_call.1} parent=11 // pred_check_branch
          %353 = sbr.rel (%p351) target = $region24
        $region23: #{tpu_custom_call.1} parent=11 // pred_region
          %s355 = ssub.s32 1024, 1024
          %356 = vsyncadd [#allocation8], %s355
          %s357 = sshll.u32 [#allocation7], 4
          %s358 = int_to_ptr.vmem [resolvable:$true] %s357
          %363 = dma.hbm_to_vmem [thread:$0]  %s3, 1024, %s358, [#allocation8], 128, 128, 8
        $region24: #{tpu_custom_call.1} parent=11 // pred_fallthru
          _
        // Predicated region
        $region25: #{tpu_custom_call.1} parent=11 // pred_check
          %p364 = pneg %p153
        $region26: #{tpu_custom_call.1} parent=11 // pred_check_branch
          %366 = sbr.rel (%p364) target = $region28
        $region27: #{tpu_custom_call.1} parent=11 // pred_region
          _
        $region28: #{tpu_custom_call.1} parent=11 // pred_fallthru
          _
        // Predicated region
        $region29: #{tpu_custom_call.1} parent=11 // pred_check
          %p367 = pneg %p174
        $region30: #{tpu_custom_call.1} parent=11 // pred_check_branch
          %369 = sbr.rel (%p367) target = $region32
        $region31: #{tpu_custom_call.1} parent=11 // pred_region
          _
        $region32: #{tpu_custom_call.1} parent=11 // pred_fallthru
          _
        // Predicated region
        $region33: #{tpu_custom_call.1} parent=11 // pred_check
          %p370 = pneg %p195
        $region34: #{tpu_custom_call.1} parent=11 // pred_check_branch
          %372 = sbr.rel (%p370) target = $region36
        $region35: #{tpu_custom_call.1} parent=11 // pred_region
          _
        $region36: #{tpu_custom_call.1} parent=11 // pred_fallthru
          _
        // Predicated region
        $region37: #{tpu_custom_call.1} parent=11 // pred_check
          %p373 = pneg %p216
        $region38: #{tpu_custom_call.1} parent=11 // pred_check_branch
          %375 = sbr.rel (%p373) target = $region40
        $region39: #{tpu_custom_call.1} parent=11 // pred_region
          %s377 = ssub.s32 1024, 1024
          %378 = vsyncadd [#allocation8], %s377
          %s379 = sshll.u32 [#allocation9], 4
          %s380 = int_to_ptr.vmem [resolvable:$true] %s379
          %385 = dma.hbm_to_vmem [thread:$0]  %s7, 1024, %s380, [#allocation8], 128, 128, 8
        $region40: #{tpu_custom_call.1} parent=11 // pred_fallthru
          _
        // Predicated region
        $region41: #{tpu_custom_call.1} parent=11 // pred_check
          %p386 = pneg %p237
        $region42: #{tpu_custom_call.1} parent=11 // pred_check_branch
          %388 = sbr.rel (%p386) target = $region44
        $region43: #{tpu_custom_call.1} parent=11 // pred_region
          %s390 = ssub.s32 1024, 1024
          %391 = vsyncadd [#allocation11], %s390
          %s392 = sshll.u32 [#allocation10], 4
          %s393 = int_to_ptr.vmem [resolvable:$true] %s392
          %398 = dma.hbm_to_vmem [thread:$0]  %s8, 1024, %s393, [#allocation11], 128, 128, 8
        $region44: #{tpu_custom_call.1} parent=11 // pred_fallthru
          _
        // Predicated region
        $region45: #{tpu_custom_call.1} parent=11 // pred_check
          %p399 = pneg %p258
        $region46: #{tpu_custom_call.1} parent=11 // pred_check_branch
          %401 = sbr.rel (%p399) target = $region48
        $region47: #{tpu_custom_call.1} parent=11 // pred_region
          _
        $region48: #{tpu_custom_call.1} parent=11 // pred_fallthru
          _
        // Predicated region
        $region49: #{tpu_custom_call.1} parent=11 // pred_check
          %p402 = pneg %p279
        $region50: #{tpu_custom_call.1} parent=11 // pred_check_branch
          %404 = sbr.rel (%p402) target = $region52
        $region51: #{tpu_custom_call.1} parent=11 // pred_region
          _
        $region52: #{tpu_custom_call.1} parent=11 // pred_fallthru
          _
        // Predicated region
        $region53: #{tpu_custom_call.1} parent=11 // pred_check
          %p405 = pneg %p300
        $region54: #{tpu_custom_call.1} parent=11 // pred_check_branch
          %407 = sbr.rel (%p405) target = $region56
        $region55: #{tpu_custom_call.1} parent=11 // pred_region
          _
        $region56: #{tpu_custom_call.1} parent=11 // pred_fallthru
          _
      $region12: #{tpu_custom_call.1} parent=5 // pred_fallthru
        _
      %p408 = scmp.lt.s32.totalorder %s24, 2
      // Predicated region
      $region57: #{tpu_custom_call.1} parent=5 // pred_check
        %p409 = pneg %p408
      $region58: #{tpu_custom_call.1} parent=5 // pred_check_branch
        %411 = sbr.rel (%p409) target = $region60
      $region59: #{tpu_custom_call.1} parent=5 // pred_region
        // Predicated region
        $region61: #{tpu_custom_call.1} parent=59 // pred_check
          %p412 = pneg %p58
        $region62: #{tpu_custom_call.1} parent=59 // pred_check_branch
          %414 = sbr.rel (%p412) target = $region64
        $region63: #{tpu_custom_call.1} parent=59 // pred_region
          %s415 = sand.u32 %s48, 1
          %s416 = scalar_lea.sflag [#allocation5], %s415
          %s417 = sand.u32 %s48, 1
          %s418 = smul.addr %s417, 16
          %s419 = scalar_lea.vmem [#allocation4], %s418
          %s420 = smul.u32 4, %s32
          %s422 = ssub.s32 256, 256
          %423 = vsyncadd %s416, %s422
          %s424 = sadd.s32 %s31, %s420
          %s425 = smul.addr %s424, 64
          %s426 = scalar_lea.hbm %s0, %s425
          %s427 = sshll.u32 %s419, 4
          %s428 = int_to_ptr.vmem [resolvable:$true] %s427
          %433 = dma.hbm_to_vmem [thread:$0]  %s426, 256, %s428, %s416, 64, 64, 4
        $region64: #{tpu_custom_call.1} parent=59 // pred_fallthru
          _
      $region60: #{tpu_custom_call.1} parent=5 // pred_fallthru
        _
      %p434 = scmp.le.s32.totalorder 1, %s24
      %p435 = scmp.lt.s32.totalorder %s24, 3
      %p436 = pnand %p434, %p435
      %p437 = pneg %p436
      // Predicated region
      $region65: #{tpu_custom_call.1} parent=5 // pred_check
        _
      $region66: #{tpu_custom_call.1} parent=5 // pred_check_branch
        %439 = sbr.rel (%p436) target = $region68
      $region67: #{tpu_custom_call.1} parent=5 // pred_region
        %s440 = ssub.s32 %s24, 1
        %s441 = sand.u32 %s51, 1
        %s442 = scalar_lea.sflag [#allocation5], %s441
        %s443 = sand.u32 %s51, 1
        %s444 = smul.addr %s443, 16
        %s445 = scalar_lea.vmem [#allocation4], %s444
        // Predicated region
        $region69: #{tpu_custom_call.1} parent=67 // pred_check
          %p446 = pneg %p64
        $region70: #{tpu_custom_call.1} parent=67 // pred_check_branch
          %448 = sbr.rel (%p446) target = $region72
        $region71: #{tpu_custom_call.1} parent=67 // pred_region
          %449 = dma.done %s442, 256
        $region72: #{tpu_custom_call.1} parent=67 // pred_fallthru
          _
        // Predicated region
        $region73: #{tpu_custom_call.1} parent=67 // pred_check
          %p450 = pneg %p132
        $region74: #{tpu_custom_call.1} parent=67 // pred_check_branch
          %452 = sbr.rel (%p450) target = $region76
        $region75: #{tpu_custom_call.1} parent=67 // pred_region
          %453 = dma.done [#allocation8], 1024
        $region76: #{tpu_custom_call.1} parent=67 // pred_fallthru
          _
        // Predicated region
        $region77: #{tpu_custom_call.1} parent=67 // pred_check
          %p454 = pneg %p216
        $region78: #{tpu_custom_call.1} parent=67 // pred_check_branch
          %456 = sbr.rel (%p454) target = $region80
        $region79: #{tpu_custom_call.1} parent=67 // pred_region
          %457 = dma.done [#allocation8], 1024
        $region80: #{tpu_custom_call.1} parent=67 // pred_fallthru
          _
        // Predicated region
        $region81: #{tpu_custom_call.1} parent=67 // pred_check
          %p458 = pneg %p237
        $region82: #{tpu_custom_call.1} parent=67 // pred_check_branch
          %460 = sbr.rel (%p458) target = $region84
        $region83: #{tpu_custom_call.1} parent=67 // pred_region
          %461 = dma.done [#allocation11], 1024
        $region84: #{tpu_custom_call.1} parent=67 // pred_fallthru
          _
        %s462 = sand.u32 %s51, 1
        %s463 = scalar_lea.sflag [#allocation5], %s462
        %s464 = sand.u32 %s51, 1
        %s465 = smul.addr %s464, 16
        %s466 = scalar_lea.vmem [#allocation4], %s465
        %p467 = pneg %p64
        %p468 = pneg %p61
        %p469 = scmp.lt.s32.totalorder %s33, 0
        %s470 = scalar_select %p469, %s33, 0
        %s471 = smul.addr %s470, 8
        %s472 = scalar_lea.vmem %s1, %s471
        %p473 = pneg %p90
        %p474 = pneg %p87
        %p475 = pneg %p111
        %p476 = pneg %p108
        %p477 = pneg %p132
        %p478 = pneg %p129
        %p479 = pneg %p153
        %p480 = pneg %p150
        %p481 = pneg %p174
        %p482 = pneg %p171
        %p483 = pneg %p195
        %p484 = pneg %p192
        %p485 = pneg %p216
        %p486 = pneg %p213
        %p487 = pneg %p237
        %p488 = pneg %p234
        %p489 = pneg %p258
        %p490 = pneg %p255
        %p491 = pneg %p279
        %p492 = pneg %p276
        %p493 = pneg %p300
        %p494 = pneg %p297
        %p495 = pneg %p326
        %p496 = pneg %p323
        %s497 = smul.u32 4, %s34
        %p498 = scmp.lt.s32.totalorder %s33, 0
        %s499 = scalar_select %p498, %s33, 0
        %s500 = smul.addr %s499, 8
        %s501 = scalar_lea.vmem %s1, %s500
        %p503 = scmp.eq.s32.totalorder %s34, 0
        // Predicated region
        $region85: #{tpu_custom_call.1} parent=67 // pred_check
          %p504 = pneg %p503
        $region86: #{tpu_custom_call.1} parent=67 // pred_check_branch
          %506 = sbr.rel (%p504) target = $region88
        $region87: #{tpu_custom_call.1} parent=67 // pred_region
          %vm507 = vcmask 523264
          %508 = vst.msk [vmem:[#allocation2] sm:$0xff] %vm507, 0.0
          %509 = vst.msk [vmem:[#allocation2 + $0x8] sm:$0xff] %vm507, 0.0
          %510 = vst.msk [vmem:[#allocation3] sm:$0xff] %vm507, 0.0
        $region88: #{tpu_custom_call.1} parent=67 // pred_fallthru
          _
        %v511 = vld [vmem:[%s2] sm:$0xff]
        %v512 = vld [vmem:[%s2 + $0x8] sm:$0xff]
        %v513 = vld [vmem:[#allocation7] sm:$0xff]
        %v514 = vld [vmem:[#allocation7 + $0x8] sm:$0xff]
        %v515 = vld [vmem:[#allocation7 + $0x10] sm:$0xff]
        %v516 = vld [vmem:[#allocation7 + $0x18] sm:$0xff]
        %v517 = vld [vmem:[#allocation7 + $0x20] sm:$0xff]
        %v518 = vld [vmem:[#allocation7 + $0x28] sm:$0xff]
        %v519 = vld [vmem:[#allocation7 + $0x30] sm:$0xff]
        %v520 = vld [vmem:[#allocation7 + $0x38] sm:$0xff]
        %v521 = vld [vmem:[%s4] sm:$0x1]
        %v523 = vlaneseq
        %v524 = vshrl.u32 %v523, 7
        %v525 = vsub.s32 0, %v524
        %v526 = vrot.slane %v521, %v525
        %v528 = vld [vmem:[%s5] sm:$0x1]
        %v530 = vlaneseq
        %v531 = vshrl.u32 %v530, 7
        %v532 = vsub.s32 0, %v531
        %v533 = vrot.slane %v528, %v532
        %v535 = vld [vmem:[%s6] sm:$0x1]
        %v537 = vlaneseq
        %v538 = vshrl.u32 %v537, 7
        %v539 = vsub.s32 0, %v538
        %v540 = vrot.slane %v535, %v539
        %v542 = vld [vmem:[#allocation9] sm:$0xff]
        %v543 = vld [vmem:[#allocation9 + $0x8] sm:$0xff]
        %v544 = vld [vmem:[#allocation9 + $0x10] sm:$0xff]
        %v545 = vld [vmem:[#allocation9 + $0x18] sm:$0xff]
        %v546 = vld [vmem:[#allocation9 + $0x20] sm:$0xff]
        %v547 = vld [vmem:[#allocation9 + $0x28] sm:$0xff]
        %v548 = vld [vmem:[#allocation9 + $0x30] sm:$0xff]
        %v549 = vld [vmem:[#allocation9 + $0x38] sm:$0xff]
        %v550 = vld [vmem:[#allocation10] sm:$0xff]
        %v551 = vld [vmem:[#allocation10 + $0x8] sm:$0xff]
        %v552 = vld [vmem:[#allocation10 + $0x10] sm:$0xff]
        %v553 = vld [vmem:[#allocation10 + $0x18] sm:$0xff]
        %v554 = vld [vmem:[#allocation10 + $0x20] sm:$0xff]
        %v555 = vld [vmem:[#allocation10 + $0x28] sm:$0xff]
        %v556 = vld [vmem:[#allocation10 + $0x30] sm:$0xff]
        %v557 = vld [vmem:[#allocation10 + $0x38] sm:$0xff]
        %v558 = vld [vmem:[%s9] sm:$0x1]
        %v560 = vlaneseq
        %v561 = vshrl.u32 %v560, 7
        %v562 = vsub.s32 0, %v561
        %v563 = vrot.slane %v558, %v562
        %v565 = vld [vmem:[%s10] sm:$0x1]
        %v567 = vlaneseq
        %v568 = vshrl.u32 %v567, 7
        %v569 = vsub.s32 0, %v568
        %v570 = vrot.slane %v565, %v569
        %v572 = vld [vmem:[%s11] sm:$0x1]
        %v574 = vlaneseq
        %v575 = vshrl.u32 %v574, 7
        %v576 = vsub.s32 0, %v575
        %v577 = vrot.slane %v572, %v576
        %v579 = vld [vmem:[%s501] sm:$0xff]
        %580 = vset.pattern.permute.xlu0 0
        %581 = vperm.xlu0 %580, %v579
        %v582 = vpop.permute.xlu0 %581
        %v583 = vld [vmem:[#allocation2] sm:$0xff]
        %s584 = scalar_lea.vmem [#allocation2], 8
        %v585 = vld [vmem:[%s584] sm:$0xff]
        %v586 = vld [vmem:[#allocation3] sm:$0xff]
        %s587 = smul.u32 %s34, 4
        %v588 = vld [vmem:[%s445] sm:$0xf]
        %v591 = vunpack.c.l.b16 %v511
        %v592 = vunpack.c.h.b16 %v511
        %v593 = vunpack.c.l.b16 %v512
        %v594 = vunpack.c.h.b16 %v512
        %v595 = vpack.c.b16 %v593, %v591
        %v596 = vpack.c.b16 %v594, %v592
        %vm599 = vcmask 130048
        %v601 = vsel %vm599, %v588, 0
        %603 = vmatprep.subr.bf16.mxu0 %v596
        %604 = vmatpush1.bf16.msra.mxu0 %v595
        %605 = vmatprep.subr.bf16.mxu0 0
        %606 = vmatpush1.bf16.msra.mxu0 0
        %607 = vmatprep.subr.bf16.mxu0 0
        %608 = vmatpush1.bf16.msra.mxu0 0
        %609 = vmatprep.subr.bf16.mxu0 0
        %610 = vmatpush1.bf16.msra.mxu0 0
        %611 = vmatprep.subr.bf16.mxu0 0
        %612 = vmatpush1.bf16.msra.mxu0 0
        %613 = vmatprep.subr.bf16.mxu0 0
        %614 = vmatpush1.bf16.msra.mxu0 0
        %615 = vmatprep.subr.bf16.mxu0 0
        %616 = vmatpush1.bf16.msra.mxu0 0
        %617 = vmatprep.subr.bf16.mxu0 0
        %618 = vmatpush1.bf16.msra.mxu0 0
        %619 = vmatprep.subr.bf16.mxu0 0
        %620 = vmatpush1.bf16.msra.mxu0 0
        %621 = vmatprep.subr.bf16.mxu0 0
        %622 = vmatpush1.bf16.msra.mxu0 0
        %623 = vmatprep.subr.bf16.mxu0 0
        %624 = vmatpush1.bf16.msra.mxu0 0
        %625 = vmatprep.subr.bf16.mxu0 0
        %626 = vmatpush1.bf16.msra.mxu0 0
        %627 = vmatprep.subr.bf16.mxu0 0
        %628 = vmatpush1.bf16.msra.mxu0 0
        %629 = vmatprep.subr.bf16.mxu0 0
        %630 = vmatpush1.bf16.msra.mxu0 0
        %631 = vmatprep.subr.bf16.mxu0 0
        %632 = vmatpush1.bf16.msra.mxu0 0
        %633 = vmatprep.subr.bf16.mxu0 0
        %634 = vmatpush1.bf16.msra.mxu0 0
        %635 = vmatprep.mubr.bf16.mxu0 0
        %636 = vmatmul.mubr.bf16.gmra.mrb[0].mxu0 %v601
        %v637 = vpop.f32.mrb[0].mxu0
        %v638 = vadd.f32 0.0, %v637
        %v639 = vpop.f32.mrb[0].mxu0
        %v640 = vadd.f32 0.0, %v639
        %v641 = vpop.f32.mrb[0].mxu0
        %v642 = vpop.f32.mrb[0].mxu0
        %643 = vdwg.mxu0
        %v644 = vpack.c.bf16 %v583, %v583
        %v653 = vunpack.c.l.b16 %v513
        %v654 = vunpack.c.h.b16 %v513
        %v655 = vunpack.c.l.b16 %v514
        %v656 = vunpack.c.h.b16 %v514
        %v657 = vunpack.c.l.b16 %v515
        %v658 = vunpack.c.h.b16 %v515
        %v659 = vunpack.c.l.b16 %v516
        %v660 = vunpack.c.h.b16 %v516
        %v661 = vunpack.c.l.b16 %v517
        %v662 = vunpack.c.h.b16 %v517
        %v663 = vunpack.c.l.b16 %v518
        %v664 = vunpack.c.h.b16 %v518
        %v665 = vunpack.c.l.b16 %v519
        %v666 = vunpack.c.h.b16 %v519
        %v667 = vunpack.c.l.b16 %v520
        %v668 = vunpack.c.h.b16 %v520
        %v669 = vpack.c.b16 %v655, %v653
        %v670 = vpack.c.b16 %v656, %v654
        %v671 = vpack.c.b16 %v659, %v657
        %v672 = vpack.c.b16 %v660, %v658
        %v673 = vpack.c.b16 %v663, %v661
        %v674 = vpack.c.b16 %v664, %v662
        %v675 = vpack.c.b16 %v667, %v665
        %v676 = vpack.c.b16 %v668, %v666
        %vm685 = vcmask 523264
        %v687 = vsel %vm685, %v644, 0
        %689 = vmatprep.subr.bf16.mxu0 %v670
        %690 = vmatpush1.bf16.msra.mxu0 %v669
        %691 = vmatprep.subr.bf16.mxu0 %v672
        %692 = vmatpush1.bf16.msra.mxu0 %v671
        %693 = vmatprep.subr.bf16.mxu0 %v674
        %694 = vmatpush1.bf16.msra.mxu0 %v673
        %695 = vmatprep.subr.bf16.mxu0 %v676
        %696 = vmatpush1.bf16.msra.mxu0 %v675
        %697 = vmatprep.subr.bf16.mxu0 0
        %698 = vmatpush1.bf16.msra.mxu0 0
        %699 = vmatprep.subr.bf16.mxu0 0
        %700 = vmatpush1.bf16.msra.mxu0 0
        %701 = vmatprep.subr.bf16.mxu0 0
        %702 = vmatpush1.bf16.msra.mxu0 0
        %703 = vmatprep.subr.bf16.mxu0 0
        %704 = vmatpush1.bf16.msra.mxu0 0
        %705 = vmatprep.subr.bf16.mxu0 0
        %706 = vmatpush1.bf16.msra.mxu0 0
        %707 = vmatprep.subr.bf16.mxu0 0
        %708 = vmatpush1.bf16.msra.mxu0 0
        %709 = vmatprep.subr.bf16.mxu0 0
        %710 = vmatpush1.bf16.msra.mxu0 0
        %711 = vmatprep.subr.bf16.mxu0 0
        %712 = vmatpush1.bf16.msra.mxu0 0
        %713 = vmatprep.subr.bf16.mxu0 0
        %714 = vmatpush1.bf16.msra.mxu0 0
        %715 = vmatprep.subr.bf16.mxu0 0
        %716 = vmatpush1.bf16.msra.mxu0 0
        %717 = vmatprep.subr.bf16.mxu0 0
        %718 = vmatpush1.bf16.msra.mxu0 0
        %719 = vmatprep.subr.bf16.mxu0 0
        %720 = vmatpush1.bf16.msra.mxu0 0
        %721 = vmatprep.mubr.bf16.mxu0 0
        %722 = vmatmul.mubr.bf16.gmra.mrb[0].mxu0 %v687
        %v723 = vpop.f32.mrb[0].mxu0
        %v724 = vadd.f32 0.0, %v723
        %v725 = vpop.f32.mrb[0].mxu0
        %v726 = vadd.f32 0.0, %v725
        %v727 = vpop.f32.mrb[0].mxu0
        %v728 = vpop.f32.mrb[0].mxu0
        %729 = vdwg.mxu0
        %v730 = vadd.f32 %v638, %v724
        %v731 = vadd.f32 %v730, %v526
        %v732 = vxor.u32 %v731, 2147483648
        %v733 = vmul.f32 %v732, 1.442695
        %v734 = vpow.pop %v733
        %v735 = vadd.f32 %v734, 1.0
        %v736 = vrcp.pop %v735
        %v737 = vmul.f32 1.0, %v736
        %v738 = vadd.f32 %v640, %v533
        %v739 = vadd.f32 %v726, %v540
        %v740 = vmul.f32 %v737, %v739
        %v741 = vadd.f32 %v738, %v740
        %v742 = vtanh.pop %v741
        %v743 = vsub.f32 1.0, %v737
        %745 = vrot.lane.b32.xlu0 %v742, 64
        %v746 = vpop.permute.xlu0 %745
        %v748 = vmul.f32 %v743, %v746
        %750 = vrot.lane.b32.xlu0 %v583, 64
        %v751 = vpop.permute.xlu0 %750
        %v753 = vmul.f32 %v737, %v751
        %v754 = vadd.f32 %v748, %v753
        %v755 = vpack.c.bf16 %v754, %v754
        %757 = vrot.lane.b32.xlu0 %v755, 64
        %v758 = vpop.permute.xlu0 %757
        %v767 = vunpack.c.l.b16 %v542
        %v768 = vunpack.c.h.b16 %v542
        %v769 = vunpack.c.l.b16 %v543
        %v770 = vunpack.c.h.b16 %v543
        %v771 = vunpack.c.l.b16 %v544
        %v772 = vunpack.c.h.b16 %v544
        %v773 = vunpack.c.l.b16 %v545
        %v774 = vunpack.c.h.b16 %v545
        %v775 = vunpack.c.l.b16 %v546
        %v776 = vunpack.c.h.b16 %v546
        %v777 = vunpack.c.l.b16 %v547
        %v778 = vunpack.c.h.b16 %v547
        %v779 = vunpack.c.l.b16 %v548
        %v780 = vunpack.c.h.b16 %v548
        %v781 = vunpack.c.l.b16 %v549
        %v782 = vunpack.c.h.b16 %v549
        %v783 = vpack.c.b16 %v769, %v767
        %v784 = vpack.c.b16 %v770, %v768
        %v785 = vpack.c.b16 %v773, %v771
        %v786 = vpack.c.b16 %v774, %v772
        %v787 = vpack.c.b16 %v777, %v775
        %v788 = vpack.c.b16 %v778, %v776
        %v789 = vpack.c.b16 %v781, %v779
        %v790 = vpack.c.b16 %v782, %v780
        %v800 = vsel %vm685, %v758, 0
        %802 = vmatprep.subr.bf16.mxu0 %v784
        %803 = vmatpush1.bf16.msra.mxu0 %v783
        %804 = vmatprep.subr.bf16.mxu0 %v786
        %805 = vmatpush1.bf16.msra.mxu0 %v785
        %806 = vmatprep.subr.bf16.mxu0 %v788
        %807 = vmatpush1.bf16.msra.mxu0 %v787
        %808 = vmatprep.subr.bf16.mxu0 %v790
        %809 = vmatpush1.bf16.msra.mxu0 %v789
        %810 = vmatprep.subr.bf16.mxu0 0
        %811 = vmatpush1.bf16.msra.mxu0 0
        %812 = vmatprep.subr.bf16.mxu0 0
        %813 = vmatpush1.bf16.msra.mxu0 0
        %814 = vmatprep.subr.bf16.mxu0 0
        %815 = vmatpush1.bf16.msra.mxu0 0
        %816 = vmatprep.subr.bf16.mxu0 0
        %817 = vmatpush1.bf16.msra.mxu0 0
        %818 = vmatprep.subr.bf16.mxu0 0
        %819 = vmatpush1.bf16.msra.mxu0 0
        %820 = vmatprep.subr.bf16.mxu0 0
        %821 = vmatpush1.bf16.msra.mxu0 0
        %822 = vmatprep.subr.bf16.mxu0 0
        %823 = vmatpush1.bf16.msra.mxu0 0
        %824 = vmatprep.subr.bf16.mxu0 0
        %825 = vmatpush1.bf16.msra.mxu0 0
        %826 = vmatprep.subr.bf16.mxu0 0
        %827 = vmatpush1.bf16.msra.mxu0 0
        %828 = vmatprep.subr.bf16.mxu0 0
        %829 = vmatpush1.bf16.msra.mxu0 0
        %830 = vmatprep.subr.bf16.mxu0 0
        %831 = vmatpush1.bf16.msra.mxu0 0
        %832 = vmatprep.subr.bf16.mxu0 0
        %833 = vmatpush1.bf16.msra.mxu0 0
        %834 = vmatprep.mubr.bf16.mxu0 0
        %835 = vmatmul.mubr.bf16.gmra.mrb[0].mxu0 %v800
        %v836 = vpop.f32.mrb[0].mxu0
        %v837 = vadd.f32 0.0, %v836
        %v838 = vpop.f32.mrb[0].mxu0
        %v839 = vadd.f32 0.0, %v838
        %v840 = vpop.f32.mrb[0].mxu0
        %v841 = vpop.f32.mrb[0].mxu0
        %842 = vdwg.mxu0
        %v843 = vpack.c.bf16 %v585, %v585
        %v852 = vunpack.c.l.b16 %v550
        %v853 = vunpack.c.h.b16 %v550
        %v854 = vunpack.c.l.b16 %v551
        %v855 = vunpack.c.h.b16 %v551
        %v856 = vunpack.c.l.b16 %v552
        %v857 = vunpack.c.h.b16 %v552
        %v858 = vunpack.c.l.b16 %v553
        %v859 = vunpack.c.h.b16 %v553
        %v860 = vunpack.c.l.b16 %v554
        %v861 = vunpack.c.h.b16 %v554
        %v862 = vunpack.c.l.b16 %v555
        %v863 = vunpack.c.h.b16 %v555
        %v864 = vunpack.c.l.b16 %v556
        %v865 = vunpack.c.h.b16 %v556
        %v866 = vunpack.c.l.b16 %v557
        %v867 = vunpack.c.h.b16 %v557
        %v868 = vpack.c.b16 %v854, %v852
        %v869 = vpack.c.b16 %v855, %v853
        %v870 = vpack.c.b16 %v858, %v856
        %v871 = vpack.c.b16 %v859, %v857
        %v872 = vpack.c.b16 %v862, %v860
        %v873 = vpack.c.b16 %v863, %v861
        %v874 = vpack.c.b16 %v866, %v864
        %v875 = vpack.c.b16 %v867, %v865
        %v885 = vsel %vm685, %v843, 0
        %887 = vmatprep.subr.bf16.mxu0 %v869
        %888 = vmatpush1.bf16.msra.mxu0 %v868
        %889 = vmatprep.subr.bf16.mxu0 %v871
        %890 = vmatpush1.bf16.msra.mxu0 %v870
        %891 = vmatprep.subr.bf16.mxu0 %v873
        %892 = vmatpush1.bf16.msra.mxu0 %v872
        %893 = vmatprep.subr.bf16.mxu0 %v875
        %894 = vmatpush1.bf16.msra.mxu0 %v874
        %895 = vmatprep.subr.bf16.mxu0 0
        %896 = vmatpush1.bf16.msra.mxu0 0
        %897 = vmatprep.subr.bf16.mxu0 0
        %898 = vmatpush1.bf16.msra.mxu0 0
        %899 = vmatprep.subr.bf16.mxu0 0
        %900 = vmatpush1.bf16.msra.mxu0 0
        %901 = vmatprep.subr.bf16.mxu0 0
        %902 = vmatpush1.bf16.msra.mxu0 0
        %903 = vmatprep.subr.bf16.mxu0 0
        %904 = vmatpush1.bf16.msra.mxu0 0
        %905 = vmatprep.subr.bf16.mxu0 0
        %906 = vmatpush1.bf16.msra.mxu0 0
        %907 = vmatprep.subr.bf16.mxu0 0
        %908 = vmatpush1.bf16.msra.mxu0 0
        %909 = vmatprep.subr.bf16.mxu0 0
        %910 = vmatpush1.bf16.msra.mxu0 0
        %911 = vmatprep.subr.bf16.mxu0 0
        %912 = vmatpush1.bf16.msra.mxu0 0
        %913 = vmatprep.subr.bf16.mxu0 0
        %914 = vmatpush1.bf16.msra.mxu0 0
        %915 = vmatprep.subr.bf16.mxu0 0
        %916 = vmatpush1.bf16.msra.mxu0 0
        %917 = vmatprep.subr.bf16.mxu0 0
        %918 = vmatpush1.bf16.msra.mxu0 0
        %919 = vmatprep.mubr.bf16.mxu0 0
        %920 = vmatmul.mubr.bf16.gmra.mrb[0].mxu0 %v885
        %v921 = vpop.f32.mrb[0].mxu0
        %v922 = vadd.f32 0.0, %v921
        %v923 = vpop.f32.mrb[0].mxu0
        %v924 = vadd.f32 0.0, %v923
        %v925 = vpop.f32.mrb[0].mxu0
        %v926 = vpop.f32.mrb[0].mxu0
        %927 = vdwg.mxu0
        %v928 = vadd.f32 %v837, %v922
        %v929 = vadd.f32 %v928, %v563
        %v930 = vxor.u32 %v929, 2147483648
        %v931 = vmul.f32 %v930, 1.442695
        %v932 = vpow.pop %v931
        %v933 = vadd.f32 %v932, 1.0
        %v934 = vrcp.pop %v933
        %v935 = vmul.f32 1.0, %v934
        %v936 = vadd.f32 %v839, %v570
        %v937 = vadd.f32 %v924, %v577
        %v938 = vmul.f32 %v935, %v937
        %v939 = vadd.f32 %v936, %v938
        %v940 = vtanh.pop %v939
        %v941 = vsub.f32 1.0, %v935
        %943 = vrot.lane.b32.xlu0 %v940, 64
        %v944 = vpop.permute.xlu0 %943
        %v946 = vmul.f32 %v941, %v944
        %948 = vrot.lane.b32.xlu0 %v585, 64
        %v949 = vpop.permute.xlu0 %948
        %v951 = vmul.f32 %v935, %v949
        %v952 = vadd.f32 %v946, %v951
        %v953 = vstv %s587
        %vm954 = vcmp.eq.s32.totalorder %v582, %v953
        %956 = vrot.lane.b32.xlu0 %v586, 64
        %v957 = vpop.permute.xlu0 %956
        %v959 = vsel %vm954, %v952, %v957
        %s960 = scalar_lea.vmem %s445, 4 [#allocation4]
        %v961 = vld [vmem:[%s960] sm:$0xf]
        %v963 = vsel %vm599, %v961, 0
        %965 = vmatprep.subr.bf16.mxu0 %v596
        %966 = vmatpush1.bf16.msra.mxu0 %v595
        %967 = vmatprep.subr.bf16.mxu0 0
        %968 = vmatpush1.bf16.msra.mxu0 0
        %969 = vmatprep.subr.bf16.mxu0 0
        %970 = vmatpush1.bf16.msra.mxu0 0
        %971 = vmatprep.subr.bf16.mxu0 0
        %972 = vmatpush1.bf16.msra.mxu0 0
        %973 = vmatprep.subr.bf16.mxu0 0
        %974 = vmatpush1.bf16.msra.mxu0 0
        %975 = vmatprep.subr.bf16.mxu0 0
        %976 = vmatpush1.bf16.msra.mxu0 0
        %977 = vmatprep.subr.bf16.mxu0 0
        %978 = vmatpush1.bf16.msra.mxu0 0
        %979 = vmatprep.subr.bf16.mxu0 0
        %980 = vmatpush1.bf16.msra.mxu0 0
        %981 = vmatprep.subr.bf16.mxu0 0
        %982 = vmatpush1.bf16.msra.mxu0 0
        %983 = vmatprep.subr.bf16.mxu0 0
        %984 = vmatpush1.bf16.msra.mxu0 0
        %985 = vmatprep.subr.bf16.mxu0 0
        %986 = vmatpush1.bf16.msra.mxu0 0
        %987 = vmatprep.subr.bf16.mxu0 0
        %988 = vmatpush1.bf16.msra.mxu0 0
        %989 = vmatprep.subr.bf16.mxu0 0
        %990 = vmatpush1.bf16.msra.mxu0 0
        %991 = vmatprep.subr.bf16.mxu0 0
        %992 = vmatpush1.bf16.msra.mxu0 0
        %993 = vmatprep.subr.bf16.mxu0 0
        %994 = vmatpush1.bf16.msra.mxu0 0
        %995 = vmatprep.subr.bf16.mxu0 0
        %996 = vmatpush1.bf16.msra.mxu0 0
        %997 = vmatprep.mubr.bf16.mxu0 0
        %998 = vmatmul.mubr.bf16.gmra.mrb[0].mxu0 %v963
        %v999 = vpop.f32.mrb[0].mxu0
        %v1000 = vadd.f32 0.0, %v999
        %v1001 = vpop.f32.mrb[0].mxu0
        %v1002 = vadd.f32 0.0, %v1001
        %v1003 = vpop.f32.mrb[0].mxu0
        %v1004 = vpop.f32.mrb[0].mxu0
        %1005 = vdwg.mxu0
        %1006 = vmatprep.subr.bf16.mxu0 %v670
        %1007 = vmatpush1.bf16.msra.mxu0 %v669
        %1008 = vmatprep.subr.bf16.mxu0 %v672
        %1009 = vmatpush1.bf16.msra.mxu0 %v671
        %1010 = vmatprep.subr.bf16.mxu0 %v674
        %1011 = vmatpush1.bf16.msra.mxu0 %v673
        %1012 = vmatprep.subr.bf16.mxu0 %v676
        %1013 = vmatpush1.bf16.msra.mxu0 %v675
        %1014 = vmatprep.subr.bf16.mxu0 0
        %1015 = vmatpush1.bf16.msra.mxu0 0
        %1016 = vmatprep.subr.bf16.mxu0 0
        %1017 = vmatpush1.bf16.msra.mxu0 0
        %1018 = vmatprep.subr.bf16.mxu0 0
        %1019 = vmatpush1.bf16.msra.mxu0 0
        %1020 = vmatprep.subr.bf16.mxu0 0
        %1021 = vmatpush1.bf16.msra.mxu0 0
        %1022 = vmatprep.subr.bf16.mxu0 0
        %1023 = vmatpush1.bf16.msra.mxu0 0
        %1024 = vmatprep.subr.bf16.mxu0 0
        %1025 = vmatpush1.bf16.msra.mxu0 0
        %1026 = vmatprep.subr.bf16.mxu0 0
        %1027 = vmatpush1.bf16.msra.mxu0 0
        %1028 = vmatprep.subr.bf16.mxu0 0
        %1029 = vmatpush1.bf16.msra.mxu0 0
        %1030 = vmatprep.subr.bf16.mxu0 0
        %1031 = vmatpush1.bf16.msra.mxu0 0
        %1032 = vmatprep.subr.bf16.mxu0 0
        %1033 = vmatpush1.bf16.msra.mxu0 0
        %1034 = vmatprep.subr.bf16.mxu0 0
        %1035 = vmatpush1.bf16.msra.mxu0 0
        %1036 = vmatprep.subr.bf16.mxu0 0
        %1037 = vmatpush1.bf16.msra.mxu0 0
        %1038 = vmatprep.mubr.bf16.mxu0 0
        %1039 = vmatmul.mubr.bf16.gmra.mrb[0].mxu0 %v800
        %v1040 = vpop.f32.mrb[0].mxu0
        %v1041 = vadd.f32 0.0, %v1040
        %v1042 = vpop.f32.mrb[0].mxu0
        %v1043 = vadd.f32 0.0, %v1042
        %v1044 = vpop.f32.mrb[0].mxu0
        %v1045 = vpop.f32.mrb[0].mxu0
        %1046 = vdwg.mxu0
        %v1047 = vadd.f32 %v1000, %v1041
        %v1048 = vadd.f32 %v1047, %v526
        %v1049 = vxor.u32 %v1048, 2147483648
        %v1050 = vmul.f32 %v1049, 1.442695
        %v1051 = vpow.pop %v1050
        %v1052 = vadd.f32 %v1051, 1.0
        %v1053 = vrcp.pop %v1052
        %v1054 = vmul.f32 1.0, %v1053
        %v1055 = vadd.f32 %v1002, %v533
        %v1056 = vadd.f32 %v1043, %v540
        %v1057 = vmul.f32 %v1054, %v1056
        %v1058 = vadd.f32 %v1055, %v1057
        %v1059 = vtanh.pop %v1058
        %v1060 = vsub.f32 1.0, %v1054
        %1062 = vrot.lane.b32.xlu0 %v1059, 64
        %v1063 = vpop.permute.xlu0 %1062
        %v1065 = vmul.f32 %v1060, %v1063
        %v1066 = vmul.f32 %v1054, %v754
        %v1067 = vadd.f32 %v1065, %v1066
        %v1068 = vpack.c.bf16 %v1067, %v1067
        %1070 = vrot.lane.b32.xlu0 %v1068, 64
        %v1071 = vpop.permute.xlu0 %1070
        %v1073 = vsel %vm685, %v1071, 0
        %1075 = vmatprep.subr.bf16.mxu0 %v784
        %1076 = vmatpush1.bf16.msra.mxu0 %v783
        %1077 = vmatprep.subr.bf16.mxu0 %v786
        %1078 = vmatpush1.bf16.msra.mxu0 %v785
        %1079 = vmatprep.subr.bf16.mxu0 %v788
        %1080 = vmatpush1.bf16.msra.mxu0 %v787
        %1081 = vmatprep.subr.bf16.mxu0 %v790
        %1082 = vmatpush1.bf16.msra.mxu0 %v789
        %1083 = vmatprep.subr.bf16.mxu0 0
        %1084 = vmatpush1.bf16.msra.mxu0 0
        %1085 = vmatprep.subr.bf16.mxu0 0
        %1086 = vmatpush1.bf16.msra.mxu0 0
        %1087 = vmatprep.subr.bf16.mxu0 0
        %1088 = vmatpush1.bf16.msra.mxu0 0
        %1089 = vmatprep.subr.bf16.mxu0 0
        %1090 = vmatpush1.bf16.msra.mxu0 0
        %1091 = vmatprep.subr.bf16.mxu0 0
        %1092 = vmatpush1.bf16.msra.mxu0 0
        %1093 = vmatprep.subr.bf16.mxu0 0
        %1094 = vmatpush1.bf16.msra.mxu0 0
        %1095 = vmatprep.subr.bf16.mxu0 0
        %1096 = vmatpush1.bf16.msra.mxu0 0
        %1097 = vmatprep.subr.bf16.mxu0 0
        %1098 = vmatpush1.bf16.msra.mxu0 0
        %1099 = vmatprep.subr.bf16.mxu0 0
        %1100 = vmatpush1.bf16.msra.mxu0 0
        %1101 = vmatprep.subr.bf16.mxu0 0
        %1102 = vmatpush1.bf16.msra.mxu0 0
        %1103 = vmatprep.subr.bf16.mxu0 0
        %1104 = vmatpush1.bf16.msra.mxu0 0
        %1105 = vmatprep.subr.bf16.mxu0 0
        %1106 = vmatpush1.bf16.msra.mxu0 0
        %1107 = vmatprep.mubr.bf16.mxu0 0
        %1108 = vmatmul.mubr.bf16.gmra.mrb[0].mxu0 %v1073
        %v1109 = vpop.f32.mrb[0].mxu0
        %v1110 = vadd.f32 0.0, %v1109
        %v1111 = vpop.f32.mrb[0].mxu0
        %v1112 = vadd.f32 0.0, %v1111
        %v1113 = vpop.f32.mrb[0].mxu0
        %v1114 = vpop.f32.mrb[0].mxu0
        %1115 = vdwg.mxu0
        %v1116 = vpack.c.bf16 %v952, %v952
        %1118 = vrot.lane.b32.xlu0 %v1116, 64
        %v1119 = vpop.permute.xlu0 %1118
        %v1121 = vsel %vm685, %v1119, 0
        %1123 = vmatprep.subr.bf16.mxu0 %v869
        %1124 = vmatpush1.bf16.msra.mxu0 %v868
        %1125 = vmatprep.subr.bf16.mxu0 %v871
        %1126 = vmatpush1.bf16.msra.mxu0 %v870
        %1127 = vmatprep.subr.bf16.mxu0 %v873
        %1128 = vmatpush1.bf16.msra.mxu0 %v872
        %1129 = vmatprep.subr.bf16.mxu0 %v875
        %1130 = vmatpush1.bf16.msra.mxu0 %v874
        %1131 = vmatprep.subr.bf16.mxu0 0
        %1132 = vmatpush1.bf16.msra.mxu0 0
        %1133 = vmatprep.subr.bf16.mxu0 0
        %1134 = vmatpush1.bf16.msra.mxu0 0
        %1135 = vmatprep.subr.bf16.mxu0 0
        %1136 = vmatpush1.bf16.msra.mxu0 0
        %1137 = vmatprep.subr.bf16.mxu0 0
        %1138 = vmatpush1.bf16.msra.mxu0 0
        %1139 = vmatprep.subr.bf16.mxu0 0
        %1140 = vmatpush1.bf16.msra.mxu0 0
        %1141 = vmatprep.subr.bf16.mxu0 0
        %1142 = vmatpush1.bf16.msra.mxu0 0
        %1143 = vmatprep.subr.bf16.mxu0 0
        %1144 = vmatpush1.bf16.msra.mxu0 0
        %1145 = vmatprep.subr.bf16.mxu0 0
        %1146 = vmatpush1.bf16.msra.mxu0 0
        %1147 = vmatprep.subr.bf16.mxu0 0
        %1148 = vmatpush1.bf16.msra.mxu0 0
        %1149 = vmatprep.subr.bf16.mxu0 0
        %1150 = vmatpush1.bf16.msra.mxu0 0
        %1151 = vmatprep.subr.bf16.mxu0 0
        %1152 = vmatpush1.bf16.msra.mxu0 0
        %1153 = vmatprep.subr.bf16.mxu0 0
        %1154 = vmatpush1.bf16.msra.mxu0 0
        %1155 = vmatprep.mubr.bf16.mxu0 0
        %1156 = vmatmul.mubr.bf16.gmra.mrb[0].mxu0 %v1121
        %v1157 = vpop.f32.mrb[0].mxu0
        %v1158 = vadd.f32 0.0, %v1157
        %v1159 = vpop.f32.mrb[0].mxu0
        %v1160 = vadd.f32 0.0, %v1159
        %v1161 = vpop.f32.mrb[0].mxu0
        %v1162 = vpop.f32.mrb[0].mxu0
        %1163 = vdwg.mxu0
        %v1164 = vadd.f32 %v1110, %v1158
        %v1165 = vadd.f32 %v1164, %v563
        %v1166 = vxor.u32 %v1165, 2147483648
        %v1167 = vmul.f32 %v1166, 1.442695
        %v1168 = vpow.pop %v1167
        %v1169 = vadd.f32 %v1168, 1.0
        %v1170 = vrcp.pop %v1169
        %v1171 = vmul.f32 1.0, %v1170
        %v1172 = vadd.f32 %v1112, %v570
        %v1173 = vadd.f32 %v1160, %v577
        %v1174 = vmul.f32 %v1171, %v1173
        %v1175 = vadd.f32 %v1172, %v1174
        %v1176 = vtanh.pop %v1175
        %v1177 = vsub.f32 1.0, %v1171
        %1179 = vrot.lane.b32.xlu0 %v1176, 64
        %v1180 = vpop.permute.xlu0 %1179
        %v1182 = vmul.f32 %v1177, %v1180
        %v1183 = vmul.f32 %v1171, %v952
        %v1184 = vadd.f32 %v1182, %v1183
        %s1185 = sadd.s32 %s587, 1
        %v1186 = vstv %s1185
        %vm1187 = vcmp.eq.s32.totalorder %v582, %v1186
        %v1188 = vsel %vm1187, %v1184, %v959
        %s1189 = scalar_lea.vmem %s445, 8 [#allocation4]
        %v1190 = vld [vmem:[%s1189] sm:$0xf]
        %v1192 = vsel %vm599, %v1190, 0
        %1194 = vmatprep.subr.bf16.mxu0 %v596
        %1195 = vmatpush1.bf16.msra.mxu0 %v595
        %1196 = vmatprep.subr.bf16.mxu0 0
        %1197 = vmatpush1.bf16.msra.mxu0 0
        %1198 = vmatprep.subr.bf16.mxu0 0
        %1199 = vmatpush1.bf16.msra.mxu0 0
        %1200 = vmatprep.subr.bf16.mxu0 0
        %1201 = vmatpush1.bf16.msra.mxu0 0
        %1202 = vmatprep.subr.bf16.mxu0 0
        %1203 = vmatpush1.bf16.msra.mxu0 0
        %1204 = vmatprep.subr.bf16.mxu0 0
        %1205 = vmatpush1.bf16.msra.mxu0 0
        %1206 = vmatprep.subr.bf16.mxu0 0
        %1207 = vmatpush1.bf16.msra.mxu0 0
        %1208 = vmatprep.subr.bf16.mxu0 0
        %1209 = vmatpush1.bf16.msra.mxu0 0
        %1210 = vmatprep.subr.bf16.mxu0 0
        %1211 = vmatpush1.bf16.msra.mxu0 0
        %1212 = vmatprep.subr.bf16.mxu0 0
        %1213 = vmatpush1.bf16.msra.mxu0 0
        %1214 = vmatprep.subr.bf16.mxu0 0
        %1215 = vmatpush1.bf16.msra.mxu0 0
        %1216 = vmatprep.subr.bf16.mxu0 0
        %1217 = vmatpush1.bf16.msra.mxu0 0
        %1218 = vmatprep.subr.bf16.mxu0 0
        %1219 = vmatpush1.bf16.msra.mxu0 0
        %1220 = vmatprep.subr.bf16.mxu0 0
        %1221 = vmatpush1.bf16.msra.mxu0 0
        %1222 = vmatprep.subr.bf16.mxu0 0
        %1223 = vmatpush1.bf16.msra.mxu0 0
        %1224 = vmatprep.subr.bf16.mxu0 0
        %1225 = vmatpush1.bf16.msra.mxu0 0
        %1226 = vmatprep.mubr.bf16.mxu0 0
        %1227 = vmatmul.mubr.bf16.gmra.mrb[0].mxu0 %v1192
        %v1228 = vpop.f32.mrb[0].mxu0
        %v1229 = vadd.f32 0.0, %v1228
        %v1230 = vpop.f32.mrb[0].mxu0
        %v1231 = vadd.f32 0.0, %v1230
        %v1232 = vpop.f32.mrb[0].mxu0
        %v1233 = vpop.f32.mrb[0].mxu0
        %1234 = vdwg.mxu0
        %1235 = vmatprep.subr.bf16.mxu0 %v670
        %1236 = vmatpush1.bf16.msra.mxu0 %v669
        %1237 = vmatprep.subr.bf16.mxu0 %v672
        %1238 = vmatpush1.bf16.msra.mxu0 %v671
        %1239 = vmatprep.subr.bf16.mxu0 %v674
        %1240 = vmatpush1.bf16.msra.mxu0 %v673
        %1241 = vmatprep.subr.bf16.mxu0 %v676
        %1242 = vmatpush1.bf16.msra.mxu0 %v675
        %1243 = vmatprep.subr.bf16.mxu0 0
        %1244 = vmatpush1.bf16.msra.mxu0 0
        %1245 = vmatprep.subr.bf16.mxu0 0
        %1246 = vmatpush1.bf16.msra.mxu0 0
        %1247 = vmatprep.subr.bf16.mxu0 0
        %1248 = vmatpush1.bf16.msra.mxu0 0
        %1249 = vmatprep.subr.bf16.mxu0 0
        %1250 = vmatpush1.bf16.msra.mxu0 0
        %1251 = vmatprep.subr.bf16.mxu0 0
        %1252 = vmatpush1.bf16.msra.mxu0 0
        %1253 = vmatprep.subr.bf16.mxu0 0
        %1254 = vmatpush1.bf16.msra.mxu0 0
        %1255 = vmatprep.subr.bf16.mxu0 0
        %1256 = vmatpush1.bf16.msra.mxu0 0
        %1257 = vmatprep.subr.bf16.mxu0 0
        %1258 = vmatpush1.bf16.msra.mxu0 0
        %1259 = vmatprep.subr.bf16.mxu0 0
        %1260 = vmatpush1.bf16.msra.mxu0 0
        %1261 = vmatprep.subr.bf16.mxu0 0
        %1262 = vmatpush1.bf16.msra.mxu0 0
        %1263 = vmatprep.subr.bf16.mxu0 0
        %1264 = vmatpush1.bf16.msra.mxu0 0
        %1265 = vmatprep.subr.bf16.mxu0 0
        %1266 = vmatpush1.bf16.msra.mxu0 0
        %1267 = vmatprep.mubr.bf16.mxu0 0
        %1268 = vmatmul.mubr.bf16.gmra.mrb[0].mxu0 %v1073
        %v1269 = vpop.f32.mrb[0].mxu0
        %v1270 = vadd.f32 0.0, %v1269
        %v1271 = vpop.f32.mrb[0].mxu0
        %v1272 = vadd.f32 0.0, %v1271
        %v1273 = vpop.f32.mrb[0].mxu0
        %v1274 = vpop.f32.mrb[0].mxu0
        %1275 = vdwg.mxu0
        %v1276 = vadd.f32 %v1229, %v1270
        %v1277 = vadd.f32 %v1276, %v526
        %v1278 = vxor.u32 %v1277, 2147483648
        %v1279 = vmul.f32 %v1278, 1.442695
        %v1280 = vpow.pop %v1279
        %v1281 = vadd.f32 %v1280, 1.0
        %v1282 = vrcp.pop %v1281
        %v1283 = vmul.f32 1.0, %v1282
        %v1284 = vadd.f32 %v1231, %v533
        %v1285 = vadd.f32 %v1272, %v540
        %v1286 = vmul.f32 %v1283, %v1285
        %v1287 = vadd.f32 %v1284, %v1286
        %v1288 = vtanh.pop %v1287
        %v1289 = vsub.f32 1.0, %v1283
        %1291 = vrot.lane.b32.xlu0 %v1288, 64
        %v1292 = vpop.permute.xlu0 %1291
        %v1294 = vmul.f32 %v1289, %v1292
        %v1295 = vmul.f32 %v1283, %v1067
        %v1296 = vadd.f32 %v1294, %v1295
        %v1297 = vpack.c.bf16 %v1296, %v1296
        %1299 = vrot.lane.b32.xlu0 %v1297, 64
        %v1300 = vpop.permute.xlu0 %1299
        %v1302 = vsel %vm685, %v1300, 0
        %1304 = vmatprep.subr.bf16.mxu0 %v784
        %1305 = vmatpush1.bf16.msra.mxu0 %v783
        %1306 = vmatprep.subr.bf16.mxu0 %v786
        %1307 = vmatpush1.bf16.msra.mxu0 %v785
        %1308 = vmatprep.subr.bf16.mxu0 %v788
        %1309 = vmatpush1.bf16.msra.mxu0 %v787
        %1310 = vmatprep.subr.bf16.mxu0 %v790
        %1311 = vmatpush1.bf16.msra.mxu0 %v789
        %1312 = vmatprep.subr.bf16.mxu0 0
        %1313 = vmatpush1.bf16.msra.mxu0 0
        %1314 = vmatprep.subr.bf16.mxu0 0
        %1315 = vmatpush1.bf16.msra.mxu0 0
        %1316 = vmatprep.subr.bf16.mxu0 0
        %1317 = vmatpush1.bf16.msra.mxu0 0
        %1318 = vmatprep.subr.bf16.mxu0 0
        %1319 = vmatpush1.bf16.msra.mxu0 0
        %1320 = vmatprep.subr.bf16.mxu0 0
        %1321 = vmatpush1.bf16.msra.mxu0 0
        %1322 = vmatprep.subr.bf16.mxu0 0
        %1323 = vmatpush1.bf16.msra.mxu0 0
        %1324 = vmatprep.subr.bf16.mxu0 0
        %1325 = vmatpush1.bf16.msra.mxu0 0
        %1326 = vmatprep.subr.bf16.mxu0 0
        %1327 = vmatpush1.bf16.msra.mxu0 0
        %1328 = vmatprep.subr.bf16.mxu0 0
        %1329 = vmatpush1.bf16.msra.mxu0 0
        %1330 = vmatprep.subr.bf16.mxu0 0
        %1331 = vmatpush1.bf16.msra.mxu0 0
        %1332 = vmatprep.subr.bf16.mxu0 0
        %1333 = vmatpush1.bf16.msra.mxu0 0
        %1334 = vmatprep.subr.bf16.mxu0 0
        %1335 = vmatpush1.bf16.msra.mxu0 0
        %1336 = vmatprep.mubr.bf16.mxu0 0
        %1337 = vmatmul.mubr.bf16.gmra.mrb[0].mxu0 %v1302
        %v1338 = vpop.f32.mrb[0].mxu0
        %v1339 = vadd.f32 0.0, %v1338
        %v1340 = vpop.f32.mrb[0].mxu0
        %v1341 = vadd.f32 0.0, %v1340
        %v1342 = vpop.f32.mrb[0].mxu0
        %v1343 = vpop.f32.mrb[0].mxu0
        %1344 = vdwg.mxu0
        %v1345 = vpack.c.bf16 %v1184, %v1184
        %1347 = vrot.lane.b32.xlu0 %v1345, 64
        %v1348 = vpop.permute.xlu0 %1347
        %v1350 = vsel %vm685, %v1348, 0
        %1352 = vmatprep.subr.bf16.mxu0 %v869
        %1353 = vmatpush1.bf16.msra.mxu0 %v868
        %1354 = vmatprep.subr.bf16.mxu0 %v871
        %1355 = vmatpush1.bf16.msra.mxu0 %v870
        %1356 = vmatprep.subr.bf16.mxu0 %v873
        %1357 = vmatpush1.bf16.msra.mxu0 %v872
        %1358 = vmatprep.subr.bf16.mxu0 %v875
        %1359 = vmatpush1.bf16.msra.mxu0 %v874
        %1360 = vmatprep.subr.bf16.mxu0 0
        %1361 = vmatpush1.bf16.msra.mxu0 0
        %1362 = vmatprep.subr.bf16.mxu0 0
        %1363 = vmatpush1.bf16.msra.mxu0 0
        %1364 = vmatprep.subr.bf16.mxu0 0
        %1365 = vmatpush1.bf16.msra.mxu0 0
        %1366 = vmatprep.subr.bf16.mxu0 0
        %1367 = vmatpush1.bf16.msra.mxu0 0
        %1368 = vmatprep.subr.bf16.mxu0 0
        %1369 = vmatpush1.bf16.msra.mxu0 0
        %1370 = vmatprep.subr.bf16.mxu0 0
        %1371 = vmatpush1.bf16.msra.mxu0 0
        %1372 = vmatprep.subr.bf16.mxu0 0
        %1373 = vmatpush1.bf16.msra.mxu0 0
        %1374 = vmatprep.subr.bf16.mxu0 0
        %1375 = vmatpush1.bf16.msra.mxu0 0
        %1376 = vmatprep.subr.bf16.mxu0 0
        %1377 = vmatpush1.bf16.msra.mxu0 0
        %1378 = vmatprep.subr.bf16.mxu0 0
        %1379 = vmatpush1.bf16.msra.mxu0 0
        %1380 = vmatprep.subr.bf16.mxu0 0
        %1381 = vmatpush1.bf16.msra.mxu0 0
        %1382 = vmatprep.subr.bf16.mxu0 0
        %1383 = vmatpush1.bf16.msra.mxu0 0
        %1384 = vmatprep.mubr.bf16.mxu0 0
        %1385 = vmatmul.mubr.bf16.gmra.mrb[0].mxu0 %v1350
        %v1386 = vpop.f32.mrb[0].mxu0
        %v1387 = vadd.f32 0.0, %v1386
        %v1388 = vpop.f32.mrb[0].mxu0
        %v1389 = vadd.f32 0.0, %v1388
        %v1390 = vpop.f32.mrb[0].mxu0
        %v1391 = vpop.f32.mrb[0].mxu0
        %1392 = vdwg.mxu0
        %v1393 = vadd.f32 %v1339, %v1387
        %v1394 = vadd.f32 %v1393, %v563
        %v1395 = vxor.u32 %v1394, 2147483648
        %v1396 = vmul.f32 %v1395, 1.442695
        %v1397 = vpow.pop %v1396
        %v1398 = vadd.f32 %v1397, 1.0
        %v1399 = vrcp.pop %v1398
        %v1400 = vmul.f32 1.0, %v1399
        %v1401 = vadd.f32 %v1341, %v570
        %v1402 = vadd.f32 %v1389, %v577
        %v1403 = vmul.f32 %v1400, %v1402
        %v1404 = vadd.f32 %v1401, %v1403
        %v1405 = vtanh.pop %v1404
        %v1406 = vsub.f32 1.0, %v1400
        %1408 = vrot.lane.b32.xlu0 %v1405, 64
        %v1409 = vpop.permute.xlu0 %1408
        %v1411 = vmul.f32 %v1406, %v1409
        %v1412 = vmul.f32 %v1400, %v1184
        %v1413 = vadd.f32 %v1411, %v1412
        %s1414 = sadd.s32 %s587, 2
        %v1415 = vstv %s1414
        %vm1416 = vcmp.eq.s32.totalorder %v582, %v1415
        %v1417 = vsel %vm1416, %v1413, %v1188
        %s1418 = scalar_lea.vmem %s445, 12 [#allocation4]
        %v1419 = vld [vmem:[%s1418] sm:$0xf]
        %v1421 = vsel %vm599, %v1419, 0
        %1423 = vmatprep.subr.bf16.mxu0 %v596
        %1424 = vmatpush1.bf16.msra.mxu0 %v595
        %1425 = vmatprep.subr.bf16.mxu0 0
        %1426 = vmatpush1.bf16.msra.mxu0 0
        %1427 = vmatprep.subr.bf16.mxu0 0
        %1428 = vmatpush1.bf16.msra.mxu0 0
        %1429 = vmatprep.subr.bf16.mxu0 0
        %1430 = vmatpush1.bf16.msra.mxu0 0
        %1431 = vmatprep.subr.bf16.mxu0 0
        %1432 = vmatpush1.bf16.msra.mxu0 0
        %1433 = vmatprep.subr.bf16.mxu0 0
        %1434 = vmatpush1.bf16.msra.mxu0 0
        %1435 = vmatprep.subr.bf16.mxu0 0
        %1436 = vmatpush1.bf16.msra.mxu0 0
        %1437 = vmatprep.subr.bf16.mxu0 0
        %1438 = vmatpush1.bf16.msra.mxu0 0
        %1439 = vmatprep.subr.bf16.mxu0 0
        %1440 = vmatpush1.bf16.msra.mxu0 0
        %1441 = vmatprep.subr.bf16.mxu0 0
        %1442 = vmatpush1.bf16.msra.mxu0 0
        %1443 = vmatprep.subr.bf16.mxu0 0
        %1444 = vmatpush1.bf16.msra.mxu0 0
        %1445 = vmatprep.subr.bf16.mxu0 0
        %1446 = vmatpush1.bf16.msra.mxu0 0
        %1447 = vmatprep.subr.bf16.mxu0 0
        %1448 = vmatpush1.bf16.msra.mxu0 0
        %1449 = vmatprep.subr.bf16.mxu0 0
        %1450 = vmatpush1.bf16.msra.mxu0 0
        %1451 = vmatprep.subr.bf16.mxu0 0
        %1452 = vmatpush1.bf16.msra.mxu0 0
        %1453 = vmatprep.subr.bf16.mxu0 0
        %1454 = vmatpush1.bf16.msra.mxu0 0
        %1455 = vmatprep.mubr.bf16.mxu0 0
        %1456 = vmatmul.mubr.bf16.gmra.mrb[0].mxu0 %v1421
        %v1457 = vpop.f32.mrb[0].mxu0
        %v1458 = vadd.f32 0.0, %v1457
        %v1459 = vpop.f32.mrb[0].mxu0
        %v1460 = vadd.f32 0.0, %v1459
        %v1461 = vpop.f32.mrb[0].mxu0
        %v1462 = vpop.f32.mrb[0].mxu0
        %1463 = vdwg.mxu0
        %1464 = vmatprep.subr.bf16.mxu0 %v670
        %1465 = vmatpush1.bf16.msra.mxu0 %v669
        %1466 = vmatprep.subr.bf16.mxu0 %v672
        %1467 = vmatpush1.bf16.msra.mxu0 %v671
        %1468 = vmatprep.subr.bf16.mxu0 %v674
        %1469 = vmatpush1.bf16.msra.mxu0 %v673
        %1470 = vmatprep.subr.bf16.mxu0 %v676
        %1471 = vmatpush1.bf16.msra.mxu0 %v675
        %1472 = vmatprep.subr.bf16.mxu0 0
        %1473 = vmatpush1.bf16.msra.mxu0 0
        %1474 = vmatprep.subr.bf16.mxu0 0
        %1475 = vmatpush1.bf16.msra.mxu0 0
        %1476 = vmatprep.subr.bf16.mxu0 0
        %1477 = vmatpush1.bf16.msra.mxu0 0
        %1478 = vmatprep.subr.bf16.mxu0 0
        %1479 = vmatpush1.bf16.msra.mxu0 0
        %1480 = vmatprep.subr.bf16.mxu0 0
        %1481 = vmatpush1.bf16.msra.mxu0 0
        %1482 = vmatprep.subr.bf16.mxu0 0
        %1483 = vmatpush1.bf16.msra.mxu0 0
        %1484 = vmatprep.subr.bf16.mxu0 0
        %1485 = vmatpush1.bf16.msra.mxu0 0
        %1486 = vmatprep.subr.bf16.mxu0 0
        %1487 = vmatpush1.bf16.msra.mxu0 0
        %1488 = vmatprep.subr.bf16.mxu0 0
        %1489 = vmatpush1.bf16.msra.mxu0 0
        %1490 = vmatprep.subr.bf16.mxu0 0
        %1491 = vmatpush1.bf16.msra.mxu0 0
        %1492 = vmatprep.subr.bf16.mxu0 0
        %1493 = vmatpush1.bf16.msra.mxu0 0
        %1494 = vmatprep.subr.bf16.mxu0 0
        %1495 = vmatpush1.bf16.msra.mxu0 0
        %1496 = vmatprep.mubr.bf16.mxu0 0
        %1497 = vmatmul.mubr.bf16.gmra.mrb[0].mxu0 %v1302
        %v1498 = vpop.f32.mrb[0].mxu0
        %v1499 = vadd.f32 0.0, %v1498
        %v1500 = vpop.f32.mrb[0].mxu0
        %v1501 = vadd.f32 0.0, %v1500
        %v1502 = vpop.f32.mrb[0].mxu0
        %v1503 = vpop.f32.mrb[0].mxu0
        %1504 = vdwg.mxu0
        %v1505 = vadd.f32 %v1458, %v1499
        %v1506 = vadd.f32 %v1505, %v526
        %v1507 = vxor.u32 %v1506, 2147483648
        %v1508 = vmul.f32 %v1507, 1.442695
        %v1509 = vpow.pop %v1508
        %v1510 = vadd.f32 %v1509, 1.0
        %v1511 = vrcp.pop %v1510
        %v1512 = vmul.f32 1.0, %v1511
        %v1513 = vadd.f32 %v1460, %v533
        %v1514 = vadd.f32 %v1501, %v540
        %v1515 = vmul.f32 %v1512, %v1514
        %v1516 = vadd.f32 %v1513, %v1515
        %v1517 = vtanh.pop %v1516
        %v1518 = vsub.f32 1.0, %v1512
        %1520 = vrot.lane.b32.xlu0 %v1517, 64
        %v1521 = vpop.permute.xlu0 %1520
        %v1523 = vmul.f32 %v1518, %v1521
        %v1524 = vmul.f32 %v1512, %v1296
        %v1525 = vadd.f32 %v1523, %v1524
        %v1526 = vpack.c.bf16 %v1525, %v1525
        %1528 = vrot.lane.b32.xlu0 %v1526, 64
        %v1529 = vpop.permute.xlu0 %1528
        %v1531 = vsel %vm685, %v1529, 0
        %1533 = vmatprep.subr.bf16.mxu0 %v784
        %1534 = vmatpush1.bf16.msra.mxu0 %v783
        %1535 = vmatprep.subr.bf16.mxu0 %v786
        %1536 = vmatpush1.bf16.msra.mxu0 %v785
        %1537 = vmatprep.subr.bf16.mxu0 %v788
        %1538 = vmatpush1.bf16.msra.mxu0 %v787
        %1539 = vmatprep.subr.bf16.mxu0 %v790
        %1540 = vmatpush1.bf16.msra.mxu0 %v789
        %1541 = vmatprep.subr.bf16.mxu0 0
        %1542 = vmatpush1.bf16.msra.mxu0 0
        %1543 = vmatprep.subr.bf16.mxu0 0
        %1544 = vmatpush1.bf16.msra.mxu0 0
        %1545 = vmatprep.subr.bf16.mxu0 0
        %1546 = vmatpush1.bf16.msra.mxu0 0
        %1547 = vmatprep.subr.bf16.mxu0 0
        %1548 = vmatpush1.bf16.msra.mxu0 0
        %1549 = vmatprep.subr.bf16.mxu0 0
        %1550 = vmatpush1.bf16.msra.mxu0 0
        %1551 = vmatprep.subr.bf16.mxu0 0
        %1552 = vmatpush1.bf16.msra.mxu0 0
        %1553 = vmatprep.subr.bf16.mxu0 0
        %1554 = vmatpush1.bf16.msra.mxu0 0
        %1555 = vmatprep.subr.bf16.mxu0 0
        %1556 = vmatpush1.bf16.msra.mxu0 0
        %1557 = vmatprep.subr.bf16.mxu0 0
        %1558 = vmatpush1.bf16.msra.mxu0 0
        %1559 = vmatprep.subr.bf16.mxu0 0
        %1560 = vmatpush1.bf16.msra.mxu0 0
        %1561 = vmatprep.subr.bf16.mxu0 0
        %1562 = vmatpush1.bf16.msra.mxu0 0
        %1563 = vmatprep.subr.bf16.mxu0 0
        %1564 = vmatpush1.bf16.msra.mxu0 0
        %1565 = vmatprep.mubr.bf16.mxu0 0
        %1566 = vmatmul.mubr.bf16.gmra.mrb[0].mxu0 %v1531
        %v1567 = vpop.f32.mrb[0].mxu0
        %v1568 = vadd.f32 0.0, %v1567
        %v1569 = vpop.f32.mrb[0].mxu0
        %v1570 = vadd.f32 0.0, %v1569
        %v1571 = vpop.f32.mrb[0].mxu0
        %v1572 = vpop.f32.mrb[0].mxu0
        %1573 = vdwg.mxu0
        %v1574 = vpack.c.bf16 %v1413, %v1413
        %1576 = vrot.lane.b32.xlu0 %v1574, 64
        %v1577 = vpop.permute.xlu0 %1576
        %v1579 = vsel %vm685, %v1577, 0
        %1581 = vmatprep.subr.bf16.mxu0 %v869
        %1582 = vmatpush1.bf16.msra.mxu0 %v868
        %1583 = vmatprep.subr.bf16.mxu0 %v871
        %1584 = vmatpush1.bf16.msra.mxu0 %v870
        %1585 = vmatprep.subr.bf16.mxu0 %v873
        %1586 = vmatpush1.bf16.msra.mxu0 %v872
        %1587 = vmatprep.subr.bf16.mxu0 %v875
        %1588 = vmatpush1.bf16.msra.mxu0 %v874
        %1589 = vmatprep.subr.bf16.mxu0 0
        %1590 = vmatpush1.bf16.msra.mxu0 0
        %1591 = vmatprep.subr.bf16.mxu0 0
        %1592 = vmatpush1.bf16.msra.mxu0 0
        %1593 = vmatprep.subr.bf16.mxu0 0
        %1594 = vmatpush1.bf16.msra.mxu0 0
        %1595 = vmatprep.subr.bf16.mxu0 0
        %1596 = vmatpush1.bf16.msra.mxu0 0
        %1597 = vmatprep.subr.bf16.mxu0 0
        %1598 = vmatpush1.bf16.msra.mxu0 0
        %1599 = vmatprep.subr.bf16.mxu0 0
        %1600 = vmatpush1.bf16.msra.mxu0 0
        %1601 = vmatprep.subr.bf16.mxu0 0
        %1602 = vmatpush1.bf16.msra.mxu0 0
        %1603 = vmatprep.subr.bf16.mxu0 0
        %1604 = vmatpush1.bf16.msra.mxu0 0
        %1605 = vmatprep.subr.bf16.mxu0 0
        %1606 = vmatpush1.bf16.msra.mxu0 0
        %1607 = vmatprep.subr.bf16.mxu0 0
        %1608 = vmatpush1.bf16.msra.mxu0 0
        %1609 = vmatprep.subr.bf16.mxu0 0
        %1610 = vmatpush1.bf16.msra.mxu0 0
        %1611 = vmatprep.subr.bf16.mxu0 0
        %1612 = vmatpush1.bf16.msra.mxu0 0
        %1613 = vmatprep.mubr.bf16.mxu0 0
        %1614 = vmatmul.mubr.bf16.gmra.mrb[0].mxu0 %v1579
        %v1615 = vpop.f32.mrb[0].mxu0
        %v1616 = vadd.f32 0.0, %v1615
        %v1617 = vpop.f32.mrb[0].mxu0
        %v1618 = vadd.f32 0.0, %v1617
        %v1619 = vpop.f32.mrb[0].mxu0
        %v1620 = vpop.f32.mrb[0].mxu0
        %1621 = vdwg.mxu0
        %v1622 = vadd.f32 %v1568, %v1616
        %v1623 = vadd.f32 %v1622, %v563
        %v1624 = vxor.u32 %v1623, 2147483648
        %v1625 = vmul.f32 %v1624, 1.442695
        %v1626 = vpow.pop %v1625
        %v1627 = vadd.f32 %v1626, 1.0
        %v1628 = vrcp.pop %v1627
        %v1629 = vmul.f32 1.0, %v1628
        %v1630 = vadd.f32 %v1570, %v570
        %v1631 = vadd.f32 %v1618, %v577
        %v1632 = vmul.f32 %v1629, %v1631
        %v1633 = vadd.f32 %v1630, %v1632
        %v1634 = vtanh.pop %v1633
        %v1635 = vsub.f32 1.0, %v1629
        %1637 = vrot.lane.b32.xlu0 %v1634, 64
        %v1638 = vpop.permute.xlu0 %1637
        %v1640 = vmul.f32 %v1635, %v1638
        %v1641 = vmul.f32 %v1629, %v1413
        %v1642 = vadd.f32 %v1640, %v1641
        %s1643 = sadd.s32 %s587, 3
        %v1644 = vstv %s1643
        %vm1645 = vcmp.eq.s32.totalorder %v582, %v1644
        %v1646 = vsel %vm1645, %v1642, %v1417
        %1648 = vrot.lane.b32.xlu0 %v1525, 64
        %v1649 = vpop.permute.xlu0 %1648
        %1651 = vst.msk [vmem:[#allocation2] sm:$0xff] %vm685, %v1649
        %1653 = vrot.lane.b32.xlu0 %v1642, 64
        %v1654 = vpop.permute.xlu0 %1653
        %1656 = vst.msk [vmem:[%s584] sm:$0xff] %vm685, %v1654
        %1658 = vrot.lane.b32.xlu0 %v1646, 64
        %v1659 = vpop.permute.xlu0 %1658
        %1661 = vst.msk [vmem:[#allocation3] sm:$0xff] %vm685, %v1659
        %p1662 = scmp.eq.s32.totalorder %s34, 1
        // Predicated region
        $region89: #{tpu_custom_call.1} parent=67 // pred_check
          %p1663 = pneg %p1662
        $region90: #{tpu_custom_call.1} parent=67 // pred_check_branch
          %1665 = sbr.rel (%p1663) target = $region92
        $region91: #{tpu_custom_call.1} parent=67 // pred_region
          %v1666 = vsel %vm685, %v1659, 0.0
          %1667 = vst [vmem:[#allocation12] sm:$0xff] %v1666
        $region92: #{tpu_custom_call.1} parent=67 // pred_fallthru
          _
        // Predicated region
        $region93: #{tpu_custom_call.1} parent=67 // pred_check
          %p1668 = pneg %p323
        $region94: #{tpu_custom_call.1} parent=67 // pred_check_branch
          %1670 = sbr.rel (%p1668) target = $region96
        $region95: #{tpu_custom_call.1} parent=67 // pred_region
          %s1672 = ssub.s32 128, 128
          %1673 = vsyncadd [#allocation6], %s1672
          %s1674 = smul.addr %s33, 128
          %s1675 = scalar_lea.hbm %s12, %s1674
          %s1677 = sshll.u32 [#allocation12], 4
          %s1678 = int_to_ptr.vmem [resolvable:$true] %s1677
          %1680 = dma.vmem_to_hbm [thread:$0]  %s1678, 128, %s1675, [#allocation6]
        $region96: #{tpu_custom_call.1} parent=67 // pred_fallthru
          _
        // Predicated region
        $region97: #{tpu_custom_call.1} parent=67 // pred_check
          %p1681 = pneg %p323
        $region98: #{tpu_custom_call.1} parent=67 // pred_check_branch
          %1683 = sbr.rel (%p1681) target = $region100
        $region99: #{tpu_custom_call.1} parent=67 // pred_region
          %1684 = dma.done [#allocation6], 128
        $region100: #{tpu_custom_call.1} parent=67 // pred_fallthru
          _
      $region68: #{tpu_custom_call.1} parent=5 // pred_fallthru
        _
      %p1685 = scmp.le.s32.totalorder 2, %s24
      // Predicated region
      $region101: #{tpu_custom_call.1} parent=5 // pred_check
        %p1686 = pneg %p1685
      $region102: #{tpu_custom_call.1} parent=5 // pred_check_branch
        %1688 = sbr.rel (%p1686) target = $region104
      $region103: #{tpu_custom_call.1} parent=5 // pred_region
        %s1689 = ssub.s32 %s24, 2
      $region104: #{tpu_custom_call.1} parent=5 // pred_fallthru
        _
    $region6: #{tpu_custom_call.1} parent=1 // loop_footer
      %s28 = sadd.s32 1, %s24
    $region7: #{tpu_custom_call.1} parent=1 // loop_footer_branch
      %23 = sbr.rel target = $region3
    $region8: #{tpu_custom_call.1} parent=1 // loop_exit
      _
    %1690 = vsyncpa [#allocation5], 1
    %s1691 = scalar_lea.sflag [#allocation5], 1
    %1692 = vsyncpa %s1691, 1
    %1693 = vsyncpa [#allocation8], 1
    %1694 = vsyncpa [#allocation11], 1
    %1695 = vsyncpa [#allocation6], 1
    %s1696 = scalar_lea.sflag [#allocation6], 1
    %1697 = vsyncpa %s1696, 1

</llo_original>
